<compile_context>
chip_gen: v7x
topology: tpu7x:2x2x1
jax: 0.10.0
libtpu: 0.0.40
codegen_flags: <defaults>
</compile_context>

<pallas_src>
import jax
import jax.numpy as jnp
from jax import lax
from jax.experimental import pallas as pl
from jax.experimental.pallas import tpu as pltpu

# ----------------------------- configuration ---------------------------------
N_J = 4                       # number of jobs
N_M = 4                       # machines (= ops per job)
B = 2                         # batch (graphs)
N_NODES = N_J * N_M
N_TOTAL = B * N_NODES
INPUT_DIM = 2
HIDDEN = 32
BN_EPS = 1e-5

# packed-parameter row offsets (all multiples of 8 sublanes -> aligned static views)
OFF_W00 = 0                               # (INPUT_DIM, H) in an 8-row slot
OFF_W01 = 8                               # (H, H)
OFF_W10 = OFF_W01 + HIDDEN
OFF_W11 = OFF_W10 + HIDDEN
OFF_AW0 = OFF_W11 + HIDDEN                # aw0[:2H] (cand_feat + h_pooled parts)
OFF_AW1 = OFF_AW0 + 2 * HIDDEN
OFF_BIAS = OFF_AW1 + HIDDEN               # 8-row bias/vector block
P_ROWS = OFF_BIAS + 8
BR_B00, BR_B01, BR_B10, BR_B11, BR_AB0, BR_AB1, BR_AW2 = range(7)

# stacked selection matrix rows: candidate one-hots, then graph-pool rows, zero pad
SEL_ROWS = ((B * N_J + B + 7) // 8) * 8

# single lane-dense output slab layout
SLAB_ROWS = 8
SLAB_W = 128
L_HP = 0                                  # h_pooled        lanes [0,32)
L_AF = HIDDEN                             # action_feature  lanes [32,64)
L_AN = 2 * HIDDEN                         # action_node     lanes [64,68)
L_MM = 2 * HIDDEN + N_M                   # mask_mch_action lanes [68,72)
L_ACT = 2 * HIDDEN + 2 * N_M              # action index    lane  72
PAD_LANES = SLAB_W - (L_ACT + 1)


# ------------------------------ fused Pallas kernel ---------------------------
def _job_actor_kernel(data_ref, adj_ref, sel_ref, aux_ref, par_ref, out_ref):
    adj = adj_ref[...]                              # (N_TOTAL, N_TOTAL)
    data = data_ref[...]                            # (N_TOTAL, INPUT_DIM + 2*N_M)
    x = data[:, 0:INPUT_DIM]
    bias = par_ref[OFF_BIAS:OFF_BIAS + 8, :]        # (8, H) aligned single load

    # ---------------- GIN layer 0 (BN scale folded into weights) --------------
    # (adj @ x) @ w00 == adj @ (x @ w00); x @ w00 has K=2 -> two VPU broadcast-FMAs.
    w00 = par_ref[OFF_W00:OFF_W00 + INPUT_DIM, :]
    xw = x[:, 0:1] * w00[0:1, :] + x[:, 1:2] * w00[1:2, :]
    t = jnp.dot(adj, xw, preferred_element_type=jnp.float32) + bias[BR_B00:BR_B00 + 1, :]
    t = jnp.maximum(t, 0.0)
    t = jnp.dot(t, par_ref[OFF_W01:OFF_W01 + HIDDEN, :],
                preferred_element_type=jnp.float32) + bias[BR_B01:BR_B01 + 1, :]
    h = jnp.maximum(t, 0.0)

    # ---------------- GIN layer 1 ----------------------------------------------
    p = jnp.dot(adj, h, preferred_element_type=jnp.float32)
    t = jnp.dot(p, par_ref[OFF_W10:OFF_W10 + HIDDEN, :],
                preferred_element_type=jnp.float32) + bias[BR_B10:BR_B10 + 1, :]
    t = jnp.maximum(t, 0.0)
    t = jnp.dot(t, par_ref[OFF_W11:OFF_W11 + HIDDEN, :],
                preferred_element_type=jnp.float32) + bias[BR_B11:BR_B11 + 1, :]
    h = jnp.maximum(t, 0.0)                          # node embeddings, stay in VMEM

    # -------- candidate gather + graph pooling: ONE selection matmul ----------
    feat = jnp.concatenate([h, data[:, INPUT_DIM:]], axis=1)      # (N_TOTAL, H+2*N_M)
    g = jnp.dot(sel_ref[...], feat, preferred_element_type=jnp.float32)  # (SEL_ROWS, H+2*N_M)
    cand = g[0:B * N_J, :]                           # (B*N_J, H+2*N_M) = [feat|dur|mm]
    hp = g[B * N_J:B * N_J + B, 0:HIDDEN]            # (B, H) h_pooled

    # -------- MLPActor layer 1: concat(cand_feat, hp_rep) @ aw0[:2H] ----------
    rrow = lax.broadcasted_iota(jnp.int32, (B * N_J, B), 0)
    rcol = lax.broadcasted_iota(jnp.int32, (B * N_J, B), 1)
    rep = ((rrow >= rcol * N_J) & (rrow < (rcol + 1) * N_J)).astype(jnp.float32)
    hp_rep = jnp.dot(rep, hp, preferred_element_type=jnp.float32)         # (B*N_J, H)
    cat = jnp.concatenate([cand[:, 0:HIDDEN], hp_rep], axis=1)            # (B*N_J, 2H)
    h1 = jnp.tanh(jnp.dot(cat, par_ref[OFF_AW0:OFF_AW0 + 2 * HIDDEN, :],
                          preferred_element_type=jnp.float32)
                  + bias[BR_AB0:BR_AB0 + 1, :])       # mch-pool term folded into bias
    h2 = jnp.tanh(jnp.dot(h1, par_ref[OFF_AW1:OFF_AW1 + HIDDEN, :],
                          preferred_element_type=jnp.float32)
                  + bias[BR_AB1:BR_AB1 + 1, :])

    # -------- scores directly in lane layout: (1, B*N_J) ----------------------
    # s = 10 * h2 @ aw2  (ab2 dropped: a uniform shift never changes argmax/softmax)
    s = lax.dot_general(bias[BR_AW2:BR_AW2 + 1, :], h2,
                        (((1,), (1,)), ((), ())),
                        preferred_element_type=jnp.float32)               # (1, B*N_J)
    aux = aux_ref[...]                                                     # (2, B*N_J)
    s = jnp.where(aux[0:1, :] > 0.5, -jnp.inf, s)

    # -------- vectorized per-graph first-argmax -> one-hot (B, B*N_J) ---------
    scol = lax.broadcasted_iota(jnp.int32, (B, B * N_J), 1)
    srow = lax.broadcasted_iota(jnp.int32, (B, B * N_J), 0)
    seg = (scol >= srow * N_J) & (scol < (srow + 1) * N_J)
    sb = jnp.where(seg, s, -jnp.inf)
    gmax = jnp.max(sb, axis=1, keepdims=True)
    colf = scol.astype(jnp.float32)
    first = jnp.min(jnp.where((sb >= gmax) & seg, colf, float(B * N_J)),
                    axis=1, keepdims=True)
    onehot = (colf == first).astype(jnp.float32)                           # (B, B*N_J)

    # -------- action gathers: ONE matmul + one lane reduce --------------------
    selact = jnp.dot(onehot, cand, preferred_element_type=jnp.float32)     # (B, H+2*N_M)
    act = jnp.sum(onehot * aux[1:2, :], axis=1, keepdims=True)             # (B, 1) float idx

    # -------- single lane-dense output slab ------------------------------------
    row = jnp.concatenate(
        [hp, selact, act, jnp.zeros((B, PAD_LANES), jnp.float32)], axis=1)  # (B, 128)
    out_ref[...] = jnp.concatenate(
        [row, jnp.zeros((SLAB_ROWS - B, SLAB_W), jnp.float32)], axis=0)     # (8, 128)


# ------------------------------ forward wrapper --------------------------------
@jax.jit
def job_actor_forward(packed, x, graph_pool, padded_nei, adj,
                      candidate, mask, mask_mch, dur):
    del padded_nei  # sum neighbor pooling path does not use it

    cand = candidate.astype(jnp.int32)                               # (B, N_J)
    glob = (cand + (jnp.arange(B, dtype=jnp.int32) * N_NODES)[:, None]).reshape(B * N_J)
    sel1h = (glob[:, None] ==
             jnp.arange(N_TOTAL, dtype=jnp.int32)[None, :]).astype(jnp.float32)
    sel = jnp.concatenate(
        [sel1h, graph_pool.astype(jnp.float32),
         jnp.zeros((SEL_ROWS - B * N_J - B, N_TOTAL), jnp.float32)], axis=0)  # (16, 32)
    data = jnp.concatenate(
        [x.astype(jnp.float32),
         dur.reshape(N_TOTAL, N_M).astype(jnp.float32),
         mask_mch.reshape(N_TOTAL, N_M).astype(jnp.float32)], axis=1)         # (32, 10)
    aux = jnp.stack(
        [mask.reshape(B * N_J).astype(jnp.float32),
         cand.reshape(B * N_J).astype(jnp.float32)], axis=0)                  # (2, 8)

    vmem = pl.BlockSpec(memory_space=pltpu.MemorySpace.VMEM)
    slab = pl.pallas_call(
        _job_actor_kernel,
        out_shape=jax.ShapeDtypeStruct((SLAB_ROWS, SLAB_W), jnp.float32),
        in_specs=[vmem, vmem, vmem, vmem, vmem],
        out_specs=vmem,
    )(data, adj.astype(jnp.float32), sel, aux, packed["stack"])

    h_pooled = slab[:B, L_HP:L_HP + HIDDEN]
    action_feature = slab[:B, L_AF:L_AF + HIDDEN]
    action_node = slab[:B, L_AN:L_AN + N_M]
    mask_mch_action = (slab[:B, L_MM:L_MM + N_M] > 0.5).reshape(B, 1, N_M)
    # float->int exact for node indices << 2^24
    action = slab[:B, L_ACT].astype(jnp.int32)
    index = jnp.int32(0)
    log_a = jnp.float32(0.0)
    return (action, index, log_a, action_node, action_feature,
            mask_mch_action, h_pooled)


# ------------------------------ parameters ------------------------------------
def _linear_init(key, fan_in, fan_out):
    k = 1.0 / jnp.sqrt(jnp.asarray(fan_in, jnp.float32))
    kw, kb = jax.random.split(key)
    w = jax.random.uniform(kw, (fan_in, fan_out), jnp.float32, -k, k)
    b = jax.random.uniform(kb, (1, fan_out), jnp.float32, -k, k)
    return w, b


def init_params(key):
    keys = jax.random.split(key, 8)
    w00, b00 = _linear_init(keys[0], INPUT_DIM, HIDDEN)   # GIN-0 MLP
    w01, b01 = _linear_init(keys[1], HIDDEN, HIDDEN)
    w10, b10 = _linear_init(keys[2], HIDDEN, HIDDEN)      # GIN-1 MLP
    w11, b11 = _linear_init(keys[3], HIDDEN, HIDDEN)
    enc = (w00, b00, w01, b01, w10, b10, w11, b11)
    aw0, ab0 = _linear_init(keys[4], 3 * HIDDEN, HIDDEN)  # MLPActor(3, 3H, H, 1)
    aw1, ab1 = _linear_init(keys[5], HIDDEN, HIDDEN)
    aw2, ab2 = _linear_init(keys[6], HIDDEN, 1)
    actor = (aw0, ab0, aw1, ab1, aw2, ab2)
    mch_input = jax.random.uniform(keys[7], (HIDDEN,), jnp.float32, -1.0, 1.0)
    return {"encoder": enc, "actor": actor, "_input": mch_input}


def pack_params(params):
    """One-time (outside jit) packing into a single 8-aligned (P_ROWS, H) stack."""
    w00, b00, w01, b01, w10, b10, w11, b11 = params["encoder"]
    aw0, ab0, aw1, ab1, aw2, _ab2 = params["actor"]
    mch = params["_input"]
    inv_bn = 1.0 / jnp.sqrt(1.0 + BN_EPS)          # eval-mode BN with fresh stats

    stack = jnp.zeros((P_ROWS, HIDDEN), jnp.float32)
    stack = stack.at[OFF_W00:OFF_W00 + INPUT_DIM, :].set(w00 * inv_bn)
    stack = stack.at[OFF_W01:OFF_W01 + HIDDEN, :].set(w01 * inv_bn)
    stack = stack.at[OFF_W10:OFF_W10 + HIDDEN, :].set(w10 * inv_bn)
    stack = stack.at[OFF_W11:OFF_W11 + HIDDEN, :].set(w11 * inv_bn)
    stack = stack.at[OFF_AW0:OFF_AW0 + 2 * HIDDEN, :].set(aw0[:2 * HIDDEN, :])
    stack = stack.at[OFF_AW1:OFF_AW1 + HIDDEN, :].set(aw1)

    bias = jnp.zeros((8, HIDDEN), jnp.float32)
    bias = bias.at[BR_B00].set((b00 * inv_bn)[0])
    bias = bias.at[BR_B01].set((b01 * inv_bn)[0])
    bias = bias.at[BR_B10].set((b10 * inv_bn)[0])
    bias = bias.at[BR_B11].set((b11 * inv_bn)[0])
    bias = bias.at[BR_AB0].set((ab0 + mch[None, :] @ aw0[2 * HIDDEN:3 * HIDDEN, :])[0])
    bias = bias.at[BR_AB1].set(ab1[0])
    bias = bias.at[BR_AW2].set(10.0 * aw2[:, 0])   # *10 score scale folded in
    stack = stack.at[OFF_BIAS:OFF_BIAS + 8, :].set(bias)
    return {"stack": stack}


# ------------------------------ pure-JAX reference ------------------------------
def _reference_forward(params, x, graph_pool, adj, candidate, mask, mask_mch, dur):
    w00, b00, w01, b01, w10, b10, w11, b11 = params["encoder"]
    aw0, ab0, aw1, ab1, aw2, ab2 = params["actor"]
    inv_bn = 1.0 / jnp.sqrt(1.0 + BN_EPS)

    def gin(h, wa, ba, wb, bb):
        p = adj @ h
        t = jnp.maximum((p @ wa + ba) * inv_bn, 0.0)
        return jnp.maximum((t @ wb + bb) * inv_bn, 0.0)

    h = gin(x, w00, b00, w01, b01)
    h = gin(h, w10, b10, w11, b11)
    h_pooled = graph_pool @ h
    batch_node = h.reshape(B, N_NODES, HIDDEN)
    cand_idx = jnp.broadcast_to(candidate[:, :, None], (B, N_J, HIDDEN))
    cand_feat = jnp.take_along_axis(batch_node, cand_idx, axis=1)
    hp_rep = jnp.broadcast_to(h_pooled[:, None, :], (B, N_J, HIDDEN))
    mch_rep = jnp.broadcast_to(params["_input"][None, None, :], (B, N_J, HIDDEN))
    concat = jnp.concatenate([cand_feat, hp_rep, mch_rep], axis=-1)
    h1 = jnp.tanh(concat @ aw0 + ab0)
    h2 = jnp.tanh(h1 @ aw1 + ab1)
    s = (h2 @ aw2 + ab2) * 10.0
    s = jnp.where(mask[..., None], -jnp.inf, s)
    sel = jnp.argmax(s[..., 0], axis=1)
    action = jnp.take_along_axis(candidate, sel[:, None], axis=1)[:, 0]
    g = action[:, None, None]
    af = jnp.take_along_axis(batch_node, jnp.broadcast_to(g, (B, 1, HIDDEN)), axis=1)[:, 0]
    an = jnp.take_along_axis(dur.reshape(B, N_NODES, N_M),
                             jnp.broadcast_to(g, (B, 1, N_M)), axis=1)[:, 0]
    mma = jnp.take_along_axis(mask_mch.reshape(B, N_NODES, N_M),
                              jnp.broadcast_to(g, (B, 1, N_M)), axis=1)
    return action, an, af, mma, h_pooled


# ------------------------------ main --------------------------------------------
if __name__ == "__main__":
    key = jax.random.PRNGKey(0)
    k_param, k_x, k_dur = jax.random.split(key, 3)

    params = init_params(k_param)
    packed = pack_params(params)

    # node features, flattened batch: (B*n_j*n_m, input_dim)
    x = jax.random.normal(k_x, (N_TOTAL, INPUT_DIM), jnp.float32)

    # per-graph adjacency: job chains + self loops, block-diagonal over batch
    a = jnp.eye(N_NODES, dtype=jnp.float32)
    a = a + jnp.eye(N_NODES, k=1, dtype=jnp.float32) + jnp.eye(N_NODES, k=-1, dtype=jnp.float32)
    adj = jnp.kron(jnp.eye(B, dtype=jnp.float32), a)                        # (N, N)

    # graph average-pooling matrix (B, N)
    graph_pool = jnp.kron(jnp.eye(B, dtype=jnp.float32),
                          jnp.ones((1, N_NODES), jnp.float32) / N_NODES)

    # candidates: first operation of each job
    candidate = jnp.tile(jnp.arange(N_J, dtype=jnp.int32) * N_M, (B, 1))    # (B, n_j)

    # job mask: last job masked out
    mask = jnp.zeros((B, N_J), dtype=bool).at[:, N_J - 1].set(True)

    # durations and machine mask
    dur = jax.random.uniform(k_dur, (B, N_NODES, N_M), jnp.float32, 1.0, 10.0)
    mask_mch = jnp.zeros((B, N_NODES, N_M), dtype=bool)

    out = job_actor_forward(packed, x, graph_pool, None, adj,
                            candidate, mask, mask_mch, dur)
    out = jax.block_until_ready(out)

    action, index, log_a, action_node, action_feature, mask_mch_action, h_pooled = out
    assert action.shape == (B,)
    assert action_node.shape == (B, N_M)
    assert action_feature.shape == (B, HIDDEN)
    assert mask_mch_action.shape == (B, 1, N_M)
    assert h_pooled.shape == (B, HIDDEN)
    assert bool(jnp.all(jnp.isfinite(h_pooled))) and bool(jnp.all(jnp.isfinite(action_feature)))

    # correctness vs pure-JAX reference (raw, unfolded parameters)
    r_action, r_an, r_af, r_mma, r_hp = _reference_forward(
        params, x, graph_pool, adj, candidate, mask, mask_mch, dur)
    assert bool(jnp.all(action == r_action))
    assert bool(jnp.allclose(h_pooled, r_hp, rtol=1e-3, atol=1e-3))
    assert bool(jnp.allclose(action_feature, r_af, rtol=1e-3, atol=1e-3))
    assert bool(jnp.allclose(action_node, r_an, rtol=1e-3, atol=1e-3))
    assert bool(jnp.all(mask_mch_action == r_mma))
    print("KERNEL_OK")
</pallas_src>

<mosaic_0001>
module attributes {stable_mosaic.version = 11 : i64} {
  func.func @_job_actor_kernel(%arg0: memref<32x10xf32, #tpu.memory_space<vmem>>, %arg1: memref<32x32xf32, #tpu.memory_space<vmem>>, %arg2: memref<16x32xf32, #tpu.memory_space<vmem>>, %arg3: memref<2x8xf32, #tpu.memory_space<vmem>>, %arg4: memref<208x32xf32, #tpu.memory_space<vmem>>, %arg5: memref<8x128xf32, #tpu.memory_space<vmem>>) attributes {dimension_semantics = [], scalar_prefetch = 0 : i64, scratch_operands = 0 : i64, tpu.core_type = #tpu.core_type<tc>} {
    %c0 = arith.constant 0 : index
    %c0_0 = arith.constant 0 : index
    %0 = vector.load %arg1[%c0, %c0_0] : memref<32x32xf32, #tpu.memory_space<vmem>>, vector<32x32xf32>
    %c0_1 = arith.constant 0 : index
    %c0_2 = arith.constant 0 : index
    %1 = vector.load %arg0[%c0_1, %c0_2] : memref<32x10xf32, #tpu.memory_space<vmem>>, vector<32x10xf32>
    %2 = vector.extract_strided_slice %1 {offsets = [0, 0], sizes = [32, 2], strides = [1, 1]} : vector<32x10xf32> to vector<32x2xf32>
    %c200 = arith.constant 200 : index
    %c0_3 = arith.constant 0 : index
    %3 = vector.load %arg4[%c200, %c0_3] : memref<208x32xf32, #tpu.memory_space<vmem>>, vector<8x32xf32>
    %c0_4 = arith.constant 0 : index
    %c0_5 = arith.constant 0 : index
    %4 = vector.load %arg4[%c0_4, %c0_5] : memref<208x32xf32, #tpu.memory_space<vmem>>, vector<2x32xf32>
    %5 = vector.extract_strided_slice %2 {offsets = [0, 0], sizes = [32, 1], strides = [1, 1]} : vector<32x2xf32> to vector<32x1xf32>
    %6 = vector.extract_strided_slice %4 {offsets = [0, 0], sizes = [1, 32], strides = [1, 1]} : vector<2x32xf32> to vector<1x32xf32>
    %7 = vector.broadcast %5 : vector<32x1xf32> to vector<32x32xf32>
    %8 = vector.broadcast %6 : vector<1x32xf32> to vector<32x32xf32>
    %9 = arith.mulf %7, %8 : vector<32x32xf32>
    %10 = vector.extract_strided_slice %2 {offsets = [0, 1], sizes = [32, 1], strides = [1, 1]} : vector<32x2xf32> to vector<32x1xf32>
    %11 = vector.extract_strided_slice %4 {offsets = [1, 0], sizes = [1, 32], strides = [1, 1]} : vector<2x32xf32> to vector<1x32xf32>
    %12 = vector.broadcast %10 : vector<32x1xf32> to vector<32x32xf32>
    %13 = vector.broadcast %11 : vector<1x32xf32> to vector<32x32xf32>
    %14 = arith.mulf %12, %13 : vector<32x32xf32>
    %15 = arith.addf %9, %14 : vector<32x32xf32>
    %cst = arith.constant dense<0.000000e+00> : vector<32x32xf32>
    %16 = tpu.matmul %0, %15, %cst {dimension_numbers = #tpu.dot_dimension_numbers<[1], [0], [0], [1], [0, 0, 1, 1], [], []>} : vector<32x32xf32>, vector<32x32xf32>, vector<32x32xf32> -> vector<32x32xf32>
    %17 = vector.extract_strided_slice %3 {offsets = [0, 0], sizes = [1, 32], strides = [1, 1]} : vector<8x32xf32> to vector<1x32xf32>
    %18 = vector.broadcast %17 : vector<1x32xf32> to vector<32x32xf32>
    %19 = arith.addf %16, %18 : vector<32x32xf32>
    %cst_6 = arith.constant 0.000000e+00 : f32
    %20 = vector.broadcast %cst_6 : f32 to vector<32x32xf32>
    %21 = arith.maximumf %19, %20 : vector<32x32xf32>
    %c8 = arith.constant 8 : index
    %c0_7 = arith.constant 0 : index
    %22 = vector.load %arg4[%c8, %c0_7] : memref<208x32xf32, #tpu.memory_space<vmem>>, vector<32x32xf32>
    %cst_8 = arith.constant dense<0.000000e+00> : vector<32x32xf32>
    %23 = tpu.matmul %21, %22, %cst_8 {dimension_numbers = #tpu.dot_dimension_numbers<[1], [0], [0], [1], [0, 0, 1, 1], [], []>} : vector<32x32xf32>, vector<32x32xf32>, vector<32x32xf32> -> vector<32x32xf32>
    %24 = vector.extract_strided_slice %3 {offsets = [1, 0], sizes = [1, 32], strides = [1, 1]} : vector<8x32xf32> to vector<1x32xf32>
    %25 = vector.broadcast %24 : vector<1x32xf32> to vector<32x32xf32>
    %26 = arith.addf %23, %25 : vector<32x32xf32>
    %cst_9 = arith.constant 0.000000e+00 : f32
    %27 = vector.broadcast %cst_9 : f32 to vector<32x32xf32>
    %28 = arith.maximumf %26, %27 : vector<32x32xf32>
    %cst_10 = arith.constant dense<0.000000e+00> : vector<32x32xf32>
    %29 = tpu.matmul %0, %28, %cst_10 {dimension_numbers = #tpu.dot_dimension_numbers<[1], [0], [0], [1], [0, 0, 1, 1], [], []>} : vector<32x32xf32>, vector<32x32xf32>, vector<32x32xf32> -> vector<32x32xf32>
    %c40 = arith.constant 40 : index
    %c0_11 = arith.constant 0 : index
    %30 = vector.load %arg4[%c40, %c0_11] : memref<208x32xf32, #tpu.memory_space<vmem>>, vector<32x32xf32>
    %cst_12 = arith.constant dense<0.000000e+00> : vector<32x32xf32>
    %31 = tpu.matmul %29, %30, %cst_12 {dimension_numbers = #tpu.dot_dimension_numbers<[1], [0], [0], [1], [0, 0, 1, 1], [], []>} : vector<32x32xf32>, vector<32x32xf32>, vector<32x32xf32> -> vector<32x32xf32>
    %32 = vector.extract_strided_slice %3 {offsets = [2, 0], sizes = [1, 32], strides = [1, 1]} : vector<8x32xf32> to vector<1x32xf32>
    %33 = vector.broadcast %32 : vector<1x32xf32> to vector<32x32xf32>
    %34 = arith.addf %31, %33 : vector<32x32xf32>
    %cst_13 = arith.constant 0.000000e+00 : f32
    %35 = vector.broadcast %cst_13 : f32 to vector<32x32xf32>
    %36 = arith.maximumf %34, %35 : vector<32x32xf32>
    %c72 = arith.constant 72 : index
    %c0_14 = arith.constant 0 : index
    %37 = vector.load %arg4[%c72, %c0_14] : memref<208x32xf32, #tpu.memory_space<vmem>>, vector<32x32xf32>
    %cst_15 = arith.constant dense<0.000000e+00> : vector<32x32xf32>
    %38 = tpu.matmul %36, %37, %cst_15 {dimension_numbers = #tpu.dot_dimension_numbers<[1], [0], [0], [1], [0, 0, 1, 1], [], []>} : vector<32x32xf32>, vector<32x32xf32>, vector<32x32xf32> -> vector<32x32xf32>
    %39 = vector.extract_strided_slice %3 {offsets = [3, 0], sizes = [1, 32], strides = [1, 1]} : vector<8x32xf32> to vector<1x32xf32>
    %40 = vector.broadcast %39 : vector<1x32xf32> to vector<32x32xf32>
    %41 = arith.addf %38, %40 : vector<32x32xf32>
    %cst_16 = arith.constant 0.000000e+00 : f32
    %42 = vector.broadcast %cst_16 : f32 to vector<32x32xf32>
    %43 = arith.maximumf %41, %42 : vector<32x32xf32>
    %44 = vector.extract_strided_slice %1 {offsets = [0, 2], sizes = [32, 8], strides = [1, 1]} : vector<32x10xf32> to vector<32x8xf32>
    %45 = tpu.concatenate %43, %44 in 1 : vector<32x32xf32>, vector<32x8xf32> -> vector<32x40xf32>
    %c0_17 = arith.constant 0 : index
    %c0_18 = arith.constant 0 : index
    %46 = vector.load %arg2[%c0_17, %c0_18] : memref<16x32xf32, #tpu.memory_space<vmem>>, vector<16x32xf32>
    %cst_19 = arith.constant dense<0.000000e+00> : vector<16x40xf32>
    %47 = tpu.matmul %46, %45, %cst_19 {dimension_numbers = #tpu.dot_dimension_numbers<[1], [0], [0], [1], [0, 0, 1, 1], [], []>} : vector<16x32xf32>, vector<32x40xf32>, vector<16x40xf32> -> vector<16x40xf32>
    %48 = vector.extract_strided_slice %47 {offsets = [0, 0], sizes = [8, 40], strides = [1, 1]} : vector<16x40xf32> to vector<8x40xf32>
    %49 = vector.extract_strided_slice %47 {offsets = [8, 0], sizes = [2, 32], strides = [1, 1]} : vector<16x40xf32> to vector<2x32xf32>
    %50 = tpu.iota {dimensions = array<i32: 0>} : vector<8x2xi32>
    %51 = tpu.iota {dimensions = array<i32: 1>} : vector<8x2xi32>
    %c4_i32 = arith.constant 4 : i32
    %52 = vector.broadcast %c4_i32 : i32 to vector<8x2xi32>
    %53 = arith.muli %51, %52 : vector<8x2xi32>
    %54 = arith.cmpi sge, %50, %53 : vector<8x2xi32>
    %c1_i32 = arith.constant 1 : i32
    %55 = vector.broadcast %c1_i32 : i32 to vector<8x2xi32>
    %56 = arith.addi %51, %55 : vector<8x2xi32>
    %c4_i32_20 = arith.constant 4 : i32
    %57 = vector.broadcast %c4_i32_20 : i32 to vector<8x2xi32>
    %58 = arith.muli %56, %57 : vector<8x2xi32>
    %59 = arith.cmpi slt, %50, %58 : vector<8x2xi32>
    %60 = arith.andi %54, %59 : vector<8x2xi1>
    %61 = arith.extui %60 : vector<8x2xi1> to vector<8x2xi32>
    %62 = arith.sitofp %61 : vector<8x2xi32> to vector<8x2xf32>
    %cst_21 = arith.constant dense<0.000000e+00> : vector<8x32xf32>
    %63 = tpu.matmul %62, %49, %cst_21 {dimension_numbers = #tpu.dot_dimension_numbers<[1], [0], [0], [1], [0, 0, 1, 1], [], []>} : vector<8x2xf32>, vector<2x32xf32>, vector<8x32xf32> -> vector<8x32xf32>
    %64 = vector.extract_strided_slice %48 {offsets = [0, 0], sizes = [8, 32], strides = [1, 1]} : vector<8x40xf32> to vector<8x32xf32>
    %65 = tpu.concatenate %64, %63 in 1 : vector<8x32xf32>, vector<8x32xf32> -> vector<8x64xf32>
    %c104 = arith.constant 104 : index
    %c0_22 = arith.constant 0 : index
    %66 = vector.load %arg4[%c104, %c0_22] : memref<208x32xf32, #tpu.memory_space<vmem>>, vector<64x32xf32>
    %cst_23 = arith.constant dense<0.000000e+00> : vector<8x32xf32>
    %67 = tpu.matmul %65, %66, %cst_23 {dimension_numbers = #tpu.dot_dimension_numbers<[1], [0], [0], [1], [0, 0, 1, 1], [], []>} : vector<8x64xf32>, vector<64x32xf32>, vector<8x32xf32> -> vector<8x32xf32>
    %68 = vector.extract_strided_slice %3 {offsets = [4, 0], sizes = [1, 32], strides = [1, 1]} : vector<8x32xf32> to vector<1x32xf32>
    %69 = vector.broadcast %68 : vector<1x32xf32> to vector<8x32xf32>
    %70 = arith.addf %67, %69 : vector<8x32xf32>
    %71 = math.tanh %70 : vector<8x32xf32>
    %c168 = arith.constant 168 : index
    %c0_24 = arith.constant 0 : index
    %72 = vector.load %arg4[%c168, %c0_24] : memref<208x32xf32, #tpu.memory_space<vmem>>, vector<32x32xf32>
    %cst_25 = arith.constant dense<0.000000e+00> : vector<8x32xf32>
    %73 = tpu.matmul %71, %72, %cst_25 {dimension_numbers = #tpu.dot_dimension_numbers<[1], [0], [0], [1], [0, 0, 1, 1], [], []>} : vector<8x32xf32>, vector<32x32xf32>, vector<8x32xf32> -> vector<8x32xf32>
    %74 = vector.extract_strided_slice %3 {offsets = [5, 0], sizes = [1, 32], strides = [1, 1]} : vector<8x32xf32> to vector<1x32xf32>
    %75 = vector.broadcast %74 : vector<1x32xf32> to vector<8x32xf32>
    %76 = arith.addf %73, %75 : vector<8x32xf32>
    %77 = math.tanh %76 : vector<8x32xf32>
    %78 = vector.extract_strided_slice %3 {offsets = [6, 0], sizes = [1, 32], strides = [1, 1]} : vector<8x32xf32> to vector<1x32xf32>
    %cst_26 = arith.constant dense<0.000000e+00> : vector<1x8xf32>
    %79 = tpu.matmul %78, %77, %cst_26 {dimension_numbers = #tpu.dot_dimension_numbers<[1], [1], [0], [0], [0, 0, 1, 0], [], []>} : vector<1x32xf32>, vector<8x32xf32>, vector<1x8xf32> -> vector<1x8xf32>
    %c0_27 = arith.constant 0 : index
    %c0_28 = arith.constant 0 : index
    %80 = vector.load %arg3[%c0_27, %c0_28] : memref<2x8xf32, #tpu.memory_space<vmem>>, vector<2x8xf32>
    %81 = vector.extract_strided_slice %80 {offsets = [0, 0], sizes = [1, 8], strides = [1, 1]} : vector<2x8xf32> to vector<1x8xf32>
    %cst_29 = arith.constant 5.000000e-01 : f32
    %82 = vector.broadcast %cst_29 : f32 to vector<1x8xf32>
    %83 = arith.cmpf ogt, %81, %82 : vector<1x8xf32>
    %cst_30 = arith.constant 0xFF800000 : f32
    %84 = vector.broadcast %cst_30 : f32 to vector<1x8xf32>
    %85 = arith.select %83, %84, %79 : vector<1x8xi1>, vector<1x8xf32>
    %86 = tpu.iota {dimensions = array<i32: 1>} : vector<2x8xi32>
    %87 = tpu.iota {dimensions = array<i32: 0>} : vector<2x8xi32>
    %c4_i32_31 = arith.constant 4 : i32
    %88 = vector.broadcast %c4_i32_31 : i32 to vector<2x8xi32>
    %89 = arith.muli %87, %88 : vector<2x8xi32>
    %90 = arith.cmpi sge, %86, %89 : vector<2x8xi32>
    %c1_i32_32 = arith.constant 1 : i32
    %91 = vector.broadcast %c1_i32_32 : i32 to vector<2x8xi32>
    %92 = arith.addi %87, %91 : vector<2x8xi32>
    %c4_i32_33 = arith.constant 4 : i32
    %93 = vector.broadcast %c4_i32_33 : i32 to vector<2x8xi32>
    %94 = arith.muli %92, %93 : vector<2x8xi32>
    %95 = arith.cmpi slt, %86, %94 : vector<2x8xi32>
    %96 = arith.andi %90, %95 : vector<2x8xi1>
    %cst_34 = arith.constant 0xFF800000 : f32
    %97 = vector.shape_cast %85 : vector<1x8xf32> to vector<1x8xf32>
    %98 = vector.broadcast %97 : vector<1x8xf32> to vector<2x8xf32>
    %99 = vector.broadcast %cst_34 : f32 to vector<2x8xf32>
    %100 = arith.select %96, %98, %99 : vector<2x8xi1>, vector<2x8xf32>
    %cst_35 = arith.constant dense<0xFF800000> : vector<2xf32>
    %101 = vector.multi_reduction <maximumf>, %100, %cst_35 [1] : vector<2x8xf32> to vector<2xf32>
    %102 = vector.shape_cast %101 : vector<2xf32> to vector<2x1xf32>
    %103 = arith.sitofp %86 : vector<2x8xi32> to vector<2x8xf32>
    %104 = vector.broadcast %102 : vector<2x1xf32> to vector<2x8xf32>
    %105 = arith.cmpf oge, %100, %104 : vector<2x8xf32>
    %106 = arith.andi %105, %96 : vector<2x8xi1>
    %cst_36 = arith.constant 8.000000e+00 : f32
    %107 = vector.broadcast %cst_36 : f32 to vector<2x8xf32>
    %108 = arith.select %106, %103, %107 : vector<2x8xi1>, vector<2x8xf32>
    %cst_37 = arith.constant dense<0x7F800000> : vector<2xf32>
    %109 = vector.multi_reduction <minimumf>, %108, %cst_37 [1] : vector<2x8xf32> to vector<2xf32>
    %110 = vector.shape_cast %109 : vector<2xf32> to vector<2x1xf32>
    %111 = vector.broadcast %110 : vector<2x1xf32> to vector<2x8xf32>
    %112 = arith.cmpf oeq, %103, %111 : vector<2x8xf32>
    %113 = arith.extui %112 : vector<2x8xi1> to vector<2x8xi32>
    %114 = arith.sitofp %113 : vector<2x8xi32> to vector<2x8xf32>
    %cst_38 = arith.constant dense<0.000000e+00> : vector<2x40xf32>
    %115 = tpu.matmul %114, %48, %cst_38 {dimension_numbers = #tpu.dot_dimension_numbers<[1], [0], [0], [1], [0, 0, 1, 1], [], []>} : vector<2x8xf32>, vector<8x40xf32>, vector<2x40xf32> -> vector<2x40xf32>
    %116 = vector.extract_strided_slice %80 {offsets = [1, 0], sizes = [1, 8], strides = [1, 1]} : vector<2x8xf32> to vector<1x8xf32>
    %117 = vector.broadcast %116 : vector<1x8xf32> to vector<2x8xf32>
    %118 = arith.mulf %114, %117 : vector<2x8xf32>
    %cst_39 = arith.constant dense<0.000000e+00> : vector<2xf32>
    %119 = vector.multi_reduction <add>, %118, %cst_39 [1] : vector<2x8xf32> to vector<2xf32>
    %120 = vector.shape_cast %119 : vector<2xf32> to vector<2x1xf32>
    %cst_40 = arith.constant 0.000000e+00 : f32
    %121 = vector.broadcast %cst_40 : f32 to vector<2x55xf32>
    %122 = tpu.concatenate %49, %115, %120, %121 in 1 : vector<2x32xf32>, vector<2x40xf32>, vector<2x1xf32>, vector<2x55xf32> -> vector<2x128xf32>
    %cst_41 = arith.constant 0.000000e+00 : f32
    %123 = vector.broadcast %cst_41 : f32 to vector<6x128xf32>
    %124 = tpu.concatenate %122, %123 in 0 : vector<2x128xf32>, vector<6x128xf32> -> vector<8x128xf32>
    %c0_42 = arith.constant 0 : index
    %c0_43 = arith.constant 0 : index
    %125 = vector.load %arg5[%c0_42, %c0_43] : memref<8x128xf32, #tpu.memory_space<vmem>>, vector<8x128xf32>
    tpu.vector_store %arg5[%c0_42, %c0_43], %124 {strides = array<i32>} : memref<8x128xf32, #tpu.memory_space<vmem>>, vector<8x128xf32>,
    return
  }
}

</mosaic_0001>

<llo_original>
// kernel: eq.8
$region0: #{eq.8}
  %s0 = inlined_call_operand.vmem [shape: s32[2,4], index: 0, kind: input, shape index: {}]
  %s1 = inlined_call_operand.vmem [shape: s32[8], index: 1, kind: output, shape index: {}]
  $region1: #{eq.8} parent=0
    #allocation0 [shape = 'u8[4096]{0}', space=vmem, size = 0x1000, scoped, tag = 'scoped mem for output reshape']
    #allocation1 [shape = 'u8[4096]{0}', space=vmem, size = 0x1000, scoped, tag = 'scoped mem for input reshape']
    %s3 = sshllo.u32 0, 2
    %v4 = vld [vmem:[%s0] sm:%s3]
    %5 = vst [vmem:[#allocation1] sm:%s3] %v4
    %v6 = vld [vmem:[#allocation1] sm:$0x1]
    %vm7 = vcmask 31744
    %8 = vst.msk [vmem:[#allocation0] sm:$0x1] %vm7, %v6
    %s9 = scalar_lea.vmem [#allocation1], 1
    %v10 = vld [vmem:[%s9] sm:$0x1]
    %11 = vrot.lane.b32.xlu0 %v10, 4
    %v12 = vpop.permute.xlu0 %11
    %vm13 = vcmask 64544
    %14 = vst.msk [vmem:[#allocation0] sm:$0x1] %vm13, %v12
    %s16 = sshllo.u32 0, 1
    %v18 = vld [vmem:[#allocation0] sm:%s16]
    %s19 = sshllo.u32 0, 1
    %20 = vst [vmem:[%s1] sm:%s19] %v18

// kernel: job_actor_forward.1
$region0: #{job_actor_forward.1}
  #allocation0 [shape = 'u32[]', space=smem, size = 0x4, offset = 0x4, fixed_abs, tag = 'smem constant byte address 0x4 - core index']
  #allocation1 [shape = 'u32[144,128]{1,0:T(1,128)}', space=vmem, size = 0x12000, scoped, tag = 'internal scratch']
  %s0 = inlined_call_operand.vmem [shape: f32[32,10], index: 0, kind: input, shape index: {}]
  %s1 = inlined_call_operand.vmem [shape: f32[32,32], index: 1, kind: input, shape index: {}]
  %s2 = inlined_call_operand.vmem [shape: f32[16,32], index: 2, kind: input, shape index: {}]
  %s3 = inlined_call_operand.vmem [shape: f32[2,8], index: 3, kind: input, shape index: {}]
  %s4 = inlined_call_operand.vmem [shape: f32[208,32], index: 4, kind: input, shape index: {}]
  %s5 = inlined_call_operand.vmem [shape: f32[8,128], index: 5, kind: output, shape index: {}]
  %s6 = sld [smem:[#allocation0]]
  $region30: #{job_actor_forward.1} parent=0
    _
  %s8 = ssub.s32 1, %s6
  %s9 = scalar_select 0, %s8, %s6
  // Predicated region
  $region2: #{job_actor_forward.1} parent=0 // pred_check
    _
  $region3: #{job_actor_forward.1} parent=0 // pred_check_branch
    %11 = sbr.rel (0) target = $region5
  $region4: #{job_actor_forward.1} parent=0 // pred_region
    _
  $region5: #{job_actor_forward.1} parent=0 // pred_fallthru
    _
  // Predicated region
  $region6: #{job_actor_forward.1} parent=0 // pred_check
    _
  $region7: #{job_actor_forward.1} parent=0 // pred_check_branch
    %13 = sbr.rel (0) target = $region9
  $region8: #{job_actor_forward.1} parent=0 // pred_region
    _
  $region9: #{job_actor_forward.1} parent=0 // pred_fallthru
    _
  // Predicated region
  $region10: #{job_actor_forward.1} parent=0 // pred_check
    _
  $region11: #{job_actor_forward.1} parent=0 // pred_check_branch
    %15 = sbr.rel (0) target = $region13
  $region12: #{job_actor_forward.1} parent=0 // pred_region
    _
  $region13: #{job_actor_forward.1} parent=0 // pred_fallthru
    _
  // Predicated region
  $region14: #{job_actor_forward.1} parent=0 // pred_check
    _
  $region15: #{job_actor_forward.1} parent=0 // pred_check_branch
    %17 = sbr.rel (0) target = $region17
  $region16: #{job_actor_forward.1} parent=0 // pred_region
    _
  $region17: #{job_actor_forward.1} parent=0 // pred_fallthru
    _
  // Predicated region
  $region18: #{job_actor_forward.1} parent=0 // pred_check
    _
  $region19: #{job_actor_forward.1} parent=0 // pred_check_branch
    %19 = sbr.rel (0) target = $region21
  $region20: #{job_actor_forward.1} parent=0 // pred_region
    _
  $region21: #{job_actor_forward.1} parent=0 // pred_fallthru
    _
  %v20 = vld [vmem:[%s1] sm:$0xff]
  %v21 = vld [vmem:[%s1 + $0x8] sm:$0xff]
  %v22 = vld [vmem:[%s1 + $0x10] sm:$0xff]
  %v23 = vld [vmem:[%s1 + $0x18] sm:$0xff]
  %v24 = vld [vmem:[%s0] sm:$0xff]
  %v25 = vld [vmem:[%s0 + $0x8] sm:$0xff]
  %v26 = vld [vmem:[%s0 + $0x10] sm:$0xff]
  %v27 = vld [vmem:[%s0 + $0x18] sm:$0xff]
  %v28 = vld [vmem:[%s4 + $0xc8] sm:$0xff]
  %v29 = vld [vmem:[%s4] sm:$0x3]
  %31 = vset.pattern.permute.xlu0 0
  %32 = vperm.xlu0 %31, %v24
  %v33 = vpop.permute.xlu0 %32
  %36 = vset.pattern.permute.xlu0 0
  %37 = vperm.xlu0 %36, %v25
  %v38 = vpop.permute.xlu0 %37
  %41 = vset.pattern.permute.xlu0 0
  %42 = vperm.xlu0 %41, %v26
  %v43 = vpop.permute.xlu0 %42
  %46 = vset.pattern.permute.xlu0 0
  %47 = vperm.xlu0 %46, %v27
  %v48 = vpop.permute.xlu0 %47
  %v50 = vlaneseq
  %v51 = vshrl.u32 %v50, 7
  %v52 = vsub.s32 0, %v51
  %v53 = vrot.slane %v29, %v52
  %v54 = vmul.f32 %v33, %v53
  %v55 = vmul.f32 %v38, %v53
  %v56 = vmul.f32 %v43, %v53
  %v57 = vmul.f32 %v48, %v53
  %58 = vset.pattern.permute.xlu0 1
  %59 = vperm.xlu0 %58, %v24
  %v60 = vpop.permute.xlu0 %59
  %62 = vset.pattern.permute.xlu0 1
  %63 = vperm.xlu0 %62, %v25
  %v64 = vpop.permute.xlu0 %63
  %66 = vset.pattern.permute.xlu0 1
  %67 = vperm.xlu0 %66, %v26
  %v68 = vpop.permute.xlu0 %67
  %70 = vset.pattern.permute.xlu0 1
  %71 = vperm.xlu0 %70, %v27
  %v72 = vpop.permute.xlu0 %71
  %v74 = vlaneseq
  %v75 = vshrl.u32 %v74, 7
  %v76 = vsub.s32 1, %v75
  %v77 = vrot.slane %v29, %v76
  %v78 = vmul.f32 %v60, %v77
  %v79 = vmul.f32 %v64, %v77
  %v80 = vmul.f32 %v68, %v77
  %v81 = vmul.f32 %v72, %v77
  %v82 = vadd.f32 %v54, %v78
  %v83 = vadd.f32 %v55, %v79
  %v84 = vadd.f32 %v56, %v80
  %v85 = vadd.f32 %v57, %v81
  %v86 = vlaneseq
  %v87 = vshrl.u32 %v86, 7
  %v88 = vsub.s32 0, %v87
  %v89 = vrot.slane %v28, %v88
  %vm90 = vcmask 261120
  %v92 = vsel %vm90, %v20, 0
  %v95 = vsel %vm90, %v21, 0
  %v98 = vsel %vm90, %v22, 0
  %v101 = vsel %vm90, %v23, 0
  %103 = vmatprep.subr.mxu0 0.0
  %104 = vmatpush1.msra.mxu0 %v82
  %105 = vmatprep.subr.mxu0 0.0
  %106 = vmatpush1.msra.mxu0 %v83
  %107 = vmatprep.subr.mxu0 0.0
  %108 = vmatpush1.msra.mxu0 %v84
  %109 = vmatprep.subr.mxu0 0.0
  %110 = vmatpush1.msra.mxu0 %v85
  %111 = vmatprep.subr.mxu0 0.0
  %112 = vmatpush1.msra.mxu0 0.0
  %113 = vmatprep.subr.mxu0 0.0
  %114 = vmatpush1.msra.mxu0 0.0
  %115 = vmatprep.subr.mxu0 0.0
  %116 = vmatpush1.msra.mxu0 0.0
  %117 = vmatprep.subr.mxu0 0.0
  %118 = vmatpush1.msra.mxu0 0.0
  %119 = vmatprep.subr.mxu0 0.0
  %120 = vmatpush1.msra.mxu0 0.0
  %121 = vmatprep.subr.mxu0 0.0
  %122 = vmatpush1.msra.mxu0 0.0
  %123 = vmatprep.subr.mxu0 0.0
  %124 = vmatpush1.msra.mxu0 0.0
  %125 = vmatprep.subr.mxu0 0.0
  %126 = vmatpush1.msra.mxu0 0.0
  %127 = vmatprep.subr.mxu0 0.0
  %128 = vmatpush1.msra.mxu0 0.0
  %129 = vmatprep.subr.mxu0 0.0
  %130 = vmatpush1.msra.mxu0 0.0
  %131 = vmatprep.subr.mxu0 0.0
  %132 = vmatpush1.msra.mxu0 0.0
  %133 = vmatprep.subr.mxu0 0.0
  %134 = vmatpush1.msra.mxu0 0.0
  %135 = vmatprep.subr.mxu0 0.0
  %136 = vmatpush1.msra.mxu0 0.0
  %137 = vmatprep.subr.mxu0 0.0
  %138 = vmatpush1.msra.mxu0 0.0
  %139 = vmatprep.subr.mxu0 0.0
  %140 = vmatpush1.msra.mxu0 0.0
  %141 = vmatprep.subr.mxu0 0.0
  %142 = vmatpush1.msra.mxu0 0.0
  %143 = vmatprep.subr.mxu0 0.0
  %144 = vmatpush1.msra.mxu0 0.0
  %145 = vmatprep.subr.mxu0 0.0
  %146 = vmatpush1.msra.mxu0 0.0
  %147 = vmatprep.subr.mxu0 0.0
  %148 = vmatpush1.msra.mxu0 0.0
  %149 = vmatprep.subr.mxu0 0.0
  %150 = vmatpush1.msra.mxu0 0.0
  %151 = vmatprep.subr.mxu0 0.0
  %152 = vmatpush1.msra.mxu0 0.0
  %153 = vmatprep.subr.mxu0 0.0
  %154 = vmatpush1.msra.mxu0 0.0
  %155 = vmatprep.subr.mxu0 0.0
  %156 = vmatpush1.msra.mxu0 0.0
  %157 = vmatprep.subr.mxu0 0.0
  %158 = vmatpush1.msra.mxu0 0.0
  %159 = vmatprep.subr.mxu0 0.0
  %160 = vmatpush1.msra.mxu0 0.0
  %161 = vmatprep.subr.mxu0 0.0
  %162 = vmatpush1.msra.mxu0 0.0
  %163 = vmatprep.subr.mxu0 0.0
  %164 = vmatpush1.msra.mxu0 0.0
  %165 = vmatprep.subr.mxu0 0.0
  %166 = vmatpush1.msra.mxu0 0.0
  %167 = vmatprep.mubr.f32.mxu0 0.0
  %168 = vmatmul.mubr.f32.gmra.mrb[0].mxu0 %v92
  %v169 = vpop.f32.mrb[0].mxu0
  %v170 = vadd.f32 %v89, %v169
  %v171 = vpop.f32.mrb[0].mxu0
  %172 = vmatprep.mubr.f32.mxu0 0.0
  %173 = vmatmul.mubr.f32.gmra.mrb[0].mxu0 %v95
  %v174 = vpop.f32.mrb[0].mxu0
  %v175 = vadd.f32 %v89, %v174
  %v176 = vpop.f32.mrb[0].mxu0
  %177 = vmatprep.mubr.f32.mxu0 0.0
  %178 = vmatmul.mubr.f32.gmra.mrb[0].mxu0 %v98
  %v179 = vpop.f32.mrb[0].mxu0
  %v180 = vadd.f32 %v89, %v179
  %v181 = vpop.f32.mrb[0].mxu0
  %182 = vmatprep.mubr.f32.mxu0 0.0
  %183 = vmatmul.mubr.f32.gmra.mrb[0].mxu0 %v101
  %v184 = vpop.f32.mrb[0].mxu0
  %v185 = vadd.f32 %v89, %v184
  %v186 = vpop.f32.mrb[0].mxu0
  %187 = vdwg.mxu0
  %v188 = vmax.f32 %v170, 0.0
  %v189 = vmax.f32 %v175, 0.0
  %v190 = vmax.f32 %v180, 0.0
  %v191 = vmax.f32 %v185, 0.0
  %v192 = vld [vmem:[%s4 + $0x8] sm:$0xff]
  %v193 = vld [vmem:[%s4 + $0x10] sm:$0xff]
  %v194 = vld [vmem:[%s4 + $0x18] sm:$0xff]
  %v195 = vld [vmem:[%s4 + $0x20] sm:$0xff]
  %v196 = vlaneseq
  %v197 = vshrl.u32 %v196, 7
  %v198 = vsub.s32 1, %v197
  %v199 = vrot.slane %v28, %v198
  %v201 = vsel %vm90, %v188, 0
  %v204 = vsel %vm90, %v189, 0
  %v207 = vsel %vm90, %v190, 0
  %v210 = vsel %vm90, %v191, 0
  %212 = vmatprep.subr.mxu0 0.0
  %213 = vmatpush1.msra.mxu0 %v192
  %214 = vmatprep.subr.mxu0 0.0
  %215 = vmatpush1.msra.mxu0 %v193
  %216 = vmatprep.subr.mxu0 0.0
  %217 = vmatpush1.msra.mxu0 %v194
  %218 = vmatprep.subr.mxu0 0.0
  %219 = vmatpush1.msra.mxu0 %v195
  %220 = vmatprep.subr.mxu0 0.0
  %221 = vmatpush1.msra.mxu0 0.0
  %222 = vmatprep.subr.mxu0 0.0
  %223 = vmatpush1.msra.mxu0 0.0
  %224 = vmatprep.subr.mxu0 0.0
  %225 = vmatpush1.msra.mxu0 0.0
  %226 = vmatprep.subr.mxu0 0.0
  %227 = vmatpush1.msra.mxu0 0.0
  %228 = vmatprep.subr.mxu0 0.0
  %229 = vmatpush1.msra.mxu0 0.0
  %230 = vmatprep.subr.mxu0 0.0
  %231 = vmatpush1.msra.mxu0 0.0
  %232 = vmatprep.subr.mxu0 0.0
  %233 = vmatpush1.msra.mxu0 0.0
  %234 = vmatprep.subr.mxu0 0.0
  %235 = vmatpush1.msra.mxu0 0.0
  %236 = vmatprep.subr.mxu0 0.0
  %237 = vmatpush1.msra.mxu0 0.0
  %238 = vmatprep.subr.mxu0 0.0
  %239 = vmatpush1.msra.mxu0 0.0
  %240 = vmatprep.subr.mxu0 0.0
  %241 = vmatpush1.msra.mxu0 0.0
  %242 = vmatprep.subr.mxu0 0.0
  %243 = vmatpush1.msra.mxu0 0.0
  %244 = vmatprep.subr.mxu0 0.0
  %245 = vmatpush1.msra.mxu0 0.0
  %246 = vmatprep.subr.mxu0 0.0
  %247 = vmatpush1.msra.mxu0 0.0
  %248 = vmatprep.subr.mxu0 0.0
  %249 = vmatpush1.msra.mxu0 0.0
  %250 = vmatprep.subr.mxu0 0.0
  %251 = vmatpush1.msra.mxu0 0.0
  %252 = vmatprep.subr.mxu0 0.0
  %253 = vmatpush1.msra.mxu0 0.0
  %254 = vmatprep.subr.mxu0 0.0
  %255 = vmatpush1.msra.mxu0 0.0
  %256 = vmatprep.subr.mxu0 0.0
  %257 = vmatpush1.msra.mxu0 0.0
  %258 = vmatprep.subr.mxu0 0.0
  %259 = vmatpush1.msra.mxu0 0.0
  %260 = vmatprep.subr.mxu0 0.0
  %261 = vmatpush1.msra.mxu0 0.0
  %262 = vmatprep.subr.mxu0 0.0
  %263 = vmatpush1.msra.mxu0 0.0
  %264 = vmatprep.subr.mxu0 0.0
  %265 = vmatpush1.msra.mxu0 0.0
  %266 = vmatprep.subr.mxu0 0.0
  %267 = vmatpush1.msra.mxu0 0.0
  %268 = vmatprep.subr.mxu0 0.0
  %269 = vmatpush1.msra.mxu0 0.0
  %270 = vmatprep.subr.mxu0 0.0
  %271 = vmatpush1.msra.mxu0 0.0
  %272 = vmatprep.subr.mxu0 0.0
  %273 = vmatpush1.msra.mxu0 0.0
  %274 = vmatprep.subr.mxu0 0.0
  %275 = vmatpush1.msra.mxu0 0.0
  %276 = vmatprep.mubr.f32.mxu0 0.0
  %277 = vmatmul.mubr.f32.gmra.mrb[0].mxu0 %v201
  %v278 = vpop.f32.mrb[0].mxu0
  %v279 = vadd.f32 %v199, %v278
  %v280 = vpop.f32.mrb[0].mxu0
  %281 = vmatprep.mubr.f32.mxu0 0.0
  %282 = vmatmul.mubr.f32.gmra.mrb[0].mxu0 %v204
  %v283 = vpop.f32.mrb[0].mxu0
  %v284 = vadd.f32 %v199, %v283
  %v285 = vpop.f32.mrb[0].mxu0
  %286 = vmatprep.mubr.f32.mxu0 0.0
  %287 = vmatmul.mubr.f32.gmra.mrb[0].mxu0 %v207
  %v288 = vpop.f32.mrb[0].mxu0
  %v289 = vadd.f32 %v199, %v288
  %v290 = vpop.f32.mrb[0].mxu0
  %291 = vmatprep.mubr.f32.mxu0 0.0
  %292 = vmatmul.mubr.f32.gmra.mrb[0].mxu0 %v210
  %v293 = vpop.f32.mrb[0].mxu0
  %v294 = vadd.f32 %v199, %v293
  %v295 = vpop.f32.mrb[0].mxu0
  %296 = vdwg.mxu0
  %v297 = vmax.f32 %v279, 0.0
  %v298 = vmax.f32 %v284, 0.0
  %v299 = vmax.f32 %v289, 0.0
  %v300 = vmax.f32 %v294, 0.0
  %301 = vmatprep.subr.mxu0 0.0
  %302 = vmatpush1.msra.mxu0 %v297
  %303 = vmatprep.subr.mxu0 0.0
  %304 = vmatpush1.msra.mxu0 %v298
  %305 = vmatprep.subr.mxu0 0.0
  %306 = vmatpush1.msra.mxu0 %v299
  %307 = vmatprep.subr.mxu0 0.0
  %308 = vmatpush1.msra.mxu0 %v300
  %309 = vmatprep.subr.mxu0 0.0
  %310 = vmatpush1.msra.mxu0 0.0
  %311 = vmatprep.subr.mxu0 0.0
  %312 = vmatpush1.msra.mxu0 0.0
  %313 = vmatprep.subr.mxu0 0.0
  %314 = vmatpush1.msra.mxu0 0.0
  %315 = vmatprep.subr.mxu0 0.0
  %316 = vmatpush1.msra.mxu0 0.0
  %317 = vmatprep.subr.mxu0 0.0
  %318 = vmatpush1.msra.mxu0 0.0
  %319 = vmatprep.subr.mxu0 0.0
  %320 = vmatpush1.msra.mxu0 0.0
  %321 = vmatprep.subr.mxu0 0.0
  %322 = vmatpush1.msra.mxu0 0.0
  %323 = vmatprep.subr.mxu0 0.0
  %324 = vmatpush1.msra.mxu0 0.0
  %325 = vmatprep.subr.mxu0 0.0
  %326 = vmatpush1.msra.mxu0 0.0
  %327 = vmatprep.subr.mxu0 0.0
  %328 = vmatpush1.msra.mxu0 0.0
  %329 = vmatprep.subr.mxu0 0.0
  %330 = vmatpush1.msra.mxu0 0.0
  %331 = vmatprep.subr.mxu0 0.0
  %332 = vmatpush1.msra.mxu0 0.0
  %333 = vmatprep.subr.mxu0 0.0
  %334 = vmatpush1.msra.mxu0 0.0
  %335 = vmatprep.subr.mxu0 0.0
  %336 = vmatpush1.msra.mxu0 0.0
  %337 = vmatprep.subr.mxu0 0.0
  %338 = vmatpush1.msra.mxu0 0.0
  %339 = vmatprep.subr.mxu0 0.0
  %340 = vmatpush1.msra.mxu0 0.0
  %341 = vmatprep.subr.mxu0 0.0
  %342 = vmatpush1.msra.mxu0 0.0
  %343 = vmatprep.subr.mxu0 0.0
  %344 = vmatpush1.msra.mxu0 0.0
  %345 = vmatprep.subr.mxu0 0.0
  %346 = vmatpush1.msra.mxu0 0.0
  %347 = vmatprep.subr.mxu0 0.0
  %348 = vmatpush1.msra.mxu0 0.0
  %349 = vmatprep.subr.mxu0 0.0
  %350 = vmatpush1.msra.mxu0 0.0
  %351 = vmatprep.subr.mxu0 0.0
  %352 = vmatpush1.msra.mxu0 0.0
  %353 = vmatprep.subr.mxu0 0.0
  %354 = vmatpush1.msra.mxu0 0.0
  %355 = vmatprep.subr.mxu0 0.0
  %356 = vmatpush1.msra.mxu0 0.0
  %357 = vmatprep.subr.mxu0 0.0
  %358 = vmatpush1.msra.mxu0 0.0
  %359 = vmatprep.subr.mxu0 0.0
  %360 = vmatpush1.msra.mxu0 0.0
  %361 = vmatprep.subr.mxu0 0.0
  %362 = vmatpush1.msra.mxu0 0.0
  %363 = vmatprep.subr.mxu0 0.0
  %364 = vmatpush1.msra.mxu0 0.0
  %365 = vmatprep.mubr.f32.mxu0 0.0
  %366 = vmatmul.mubr.f32.gmra.mrb[0].mxu0 %v92
  %v367 = vpop.f32.mrb[0].mxu0
  %v368 = vadd.f32 0.0, %v367
  %v369 = vpop.f32.mrb[0].mxu0
  %370 = vmatprep.mubr.f32.mxu0 0.0
  %371 = vmatmul.mubr.f32.gmra.mrb[0].mxu0 %v95
  %v372 = vpop.f32.mrb[0].mxu0
  %v373 = vadd.f32 0.0, %v372
  %v374 = vpop.f32.mrb[0].mxu0
  %375 = vmatprep.mubr.f32.mxu0 0.0
  %376 = vmatmul.mubr.f32.gmra.mrb[0].mxu0 %v98
  %v377 = vpop.f32.mrb[0].mxu0
  %v378 = vadd.f32 0.0, %v377
  %v379 = vpop.f32.mrb[0].mxu0
  %380 = vmatprep.mubr.f32.mxu0 0.0
  %381 = vmatmul.mubr.f32.gmra.mrb[0].mxu0 %v101
  %v382 = vpop.f32.mrb[0].mxu0
  %v383 = vadd.f32 0.0, %v382
  %v384 = vpop.f32.mrb[0].mxu0
  %385 = vdwg.mxu0
  %v386 = vld [vmem:[%s4 + $0x28] sm:$0xff]
  %v387 = vld [vmem:[%s4 + $0x30] sm:$0xff]
  %v388 = vld [vmem:[%s4 + $0x38] sm:$0xff]
  %v389 = vld [vmem:[%s4 + $0x40] sm:$0xff]
  %v390 = vlaneseq
  %v391 = vshrl.u32 %v390, 7
  %v392 = vsub.s32 2, %v391
  %v393 = vrot.slane %v28, %v392
  %v395 = vsel %vm90, %v368, 0
  %v398 = vsel %vm90, %v373, 0
  %v401 = vsel %vm90, %v378, 0
  %v404 = vsel %vm90, %v383, 0
  %406 = vmatprep.subr.mxu0 0.0
  %407 = vmatpush1.msra.mxu0 %v386
  %408 = vmatprep.subr.mxu0 0.0
  %409 = vmatpush1.msra.mxu0 %v387
  %410 = vmatprep.subr.mxu0 0.0
  %411 = vmatpush1.msra.mxu0 %v388
  %412 = vmatprep.subr.mxu0 0.0
  %413 = vmatpush1.msra.mxu0 %v389
  %414 = vmatprep.subr.mxu0 0.0
  %415 = vmatpush1.msra.mxu0 0.0
  %416 = vmatprep.subr.mxu0 0.0
  %417 = vmatpush1.msra.mxu0 0.0
  %418 = vmatprep.subr.mxu0 0.0
  %419 = vmatpush1.msra.mxu0 0.0
  %420 = vmatprep.subr.mxu0 0.0
  %421 = vmatpush1.msra.mxu0 0.0
  %422 = vmatprep.subr.mxu0 0.0
  %423 = vmatpush1.msra.mxu0 0.0
  %424 = vmatprep.subr.mxu0 0.0
  %425 = vmatpush1.msra.mxu0 0.0
  %426 = vmatprep.subr.mxu0 0.0
  %427 = vmatpush1.msra.mxu0 0.0
  %428 = vmatprep.subr.mxu0 0.0
  %429 = vmatpush1.msra.mxu0 0.0
  %430 = vmatprep.subr.mxu0 0.0
  %431 = vmatpush1.msra.mxu0 0.0
  %432 = vmatprep.subr.mxu0 0.0
  %433 = vmatpush1.msra.mxu0 0.0
  %434 = vmatprep.subr.mxu0 0.0
  %435 = vmatpush1.msra.mxu0 0.0
  %436 = vmatprep.subr.mxu0 0.0
  %437 = vmatpush1.msra.mxu0 0.0
  %438 = vmatprep.subr.mxu0 0.0
  %439 = vmatpush1.msra.mxu0 0.0
  %440 = vmatprep.subr.mxu0 0.0
  %441 = vmatpush1.msra.mxu0 0.0
  %442 = vmatprep.subr.mxu0 0.0
  %443 = vmatpush1.msra.mxu0 0.0
  %444 = vmatprep.subr.mxu0 0.0
  %445 = vmatpush1.msra.mxu0 0.0
  %446 = vmatprep.subr.mxu0 0.0
  %447 = vmatpush1.msra.mxu0 0.0
  %448 = vmatprep.subr.mxu0 0.0
  %449 = vmatpush1.msra.mxu0 0.0
  %450 = vmatprep.subr.mxu0 0.0
  %451 = vmatpush1.msra.mxu0 0.0
  %452 = vmatprep.subr.mxu0 0.0
  %453 = vmatpush1.msra.mxu0 0.0
  %454 = vmatprep.subr.mxu0 0.0
  %455 = vmatpush1.msra.mxu0 0.0
  %456 = vmatprep.subr.mxu0 0.0
  %457 = vmatpush1.msra.mxu0 0.0
  %458 = vmatprep.subr.mxu0 0.0
  %459 = vmatpush1.msra.mxu0 0.0
  %460 = vmatprep.subr.mxu0 0.0
  %461 = vmatpush1.msra.mxu0 0.0
  %462 = vmatprep.subr.mxu0 0.0
  %463 = vmatpush1.msra.mxu0 0.0
  %464 = vmatprep.subr.mxu0 0.0
  %465 = vmatpush1.msra.mxu0 0.0
  %466 = vmatprep.subr.mxu0 0.0
  %467 = vmatpush1.msra.mxu0 0.0
  %468 = vmatprep.subr.mxu0 0.0
  %469 = vmatpush1.msra.mxu0 0.0
  %470 = vmatprep.mubr.f32.mxu0 0.0
  %471 = vmatmul.mubr.f32.gmra.mrb[0].mxu0 %v395
  %v472 = vpop.f32.mrb[0].mxu0
  %v473 = vadd.f32 %v393, %v472
  %v474 = vpop.f32.mrb[0].mxu0
  %475 = vmatprep.mubr.f32.mxu0 0.0
  %476 = vmatmul.mubr.f32.gmra.mrb[0].mxu0 %v398
  %v477 = vpop.f32.mrb[0].mxu0
  %v478 = vadd.f32 %v393, %v477
  %v479 = vpop.f32.mrb[0].mxu0
  %480 = vmatprep.mubr.f32.mxu0 0.0
  %481 = vmatmul.mubr.f32.gmra.mrb[0].mxu0 %v401
  %v482 = vpop.f32.mrb[0].mxu0
  %v483 = vadd.f32 %v393, %v482
  %v484 = vpop.f32.mrb[0].mxu0
  %485 = vmatprep.mubr.f32.mxu0 0.0
  %486 = vmatmul.mubr.f32.gmra.mrb[0].mxu0 %v404
  %v487 = vpop.f32.mrb[0].mxu0
  %v488 = vadd.f32 %v393, %v487
  %v489 = vpop.f32.mrb[0].mxu0
  %490 = vdwg.mxu0
  %v491 = vmax.f32 %v473, 0.0
  %v492 = vmax.f32 %v478, 0.0
  %v493 = vmax.f32 %v483, 0.0
  %v494 = vmax.f32 %v488, 0.0
  %v495 = vld [vmem:[%s4 + $0x48] sm:$0xff]
  %v496 = vld [vmem:[%s4 + $0x50] sm:$0xff]
  %v497 = vld [vmem:[%s4 + $0x58] sm:$0xff]
  %v498 = vld [vmem:[%s4 + $0x60] sm:$0xff]
  %v499 = vlaneseq
  %v500 = vshrl.u32 %v499, 7
  %v501 = vsub.s32 3, %v500
  %v502 = vrot.slane %v28, %v501
  %v504 = vsel %vm90, %v491, 0
  %v507 = vsel %vm90, %v492, 0
  %v510 = vsel %vm90, %v493, 0
  %v513 = vsel %vm90, %v494, 0
  %515 = vmatprep.subr.mxu0 0.0
  %516 = vmatpush1.msra.mxu0 %v495
  %517 = vmatprep.subr.mxu0 0.0
  %518 = vmatpush1.msra.mxu0 %v496
  %519 = vmatprep.subr.mxu0 0.0
  %520 = vmatpush1.msra.mxu0 %v497
  %521 = vmatprep.subr.mxu0 0.0
  %522 = vmatpush1.msra.mxu0 %v498
  %523 = vmatprep.subr.mxu0 0.0
  %524 = vmatpush1.msra.mxu0 0.0
  %525 = vmatprep.subr.mxu0 0.0
  %526 = vmatpush1.msra.mxu0 0.0
  %527 = vmatprep.subr.mxu0 0.0
  %528 = vmatpush1.msra.mxu0 0.0
  %529 = vmatprep.subr.mxu0 0.0
  %530 = vmatpush1.msra.mxu0 0.0
  %531 = vmatprep.subr.mxu0 0.0
  %532 = vmatpush1.msra.mxu0 0.0
  %533 = vmatprep.subr.mxu0 0.0
  %534 = vmatpush1.msra.mxu0 0.0
  %535 = vmatprep.subr.mxu0 0.0
  %536 = vmatpush1.msra.mxu0 0.0
  %537 = vmatprep.subr.mxu0 0.0
  %538 = vmatpush1.msra.mxu0 0.0
  %539 = vmatprep.subr.mxu0 0.0
  %540 = vmatpush1.msra.mxu0 0.0
  %541 = vmatprep.subr.mxu0 0.0
  %542 = vmatpush1.msra.mxu0 0.0
  %543 = vmatprep.subr.mxu0 0.0
  %544 = vmatpush1.msra.mxu0 0.0
  %545 = vmatprep.subr.mxu0 0.0
  %546 = vmatpush1.msra.mxu0 0.0
  %547 = vmatprep.subr.mxu0 0.0
  %548 = vmatpush1.msra.mxu0 0.0
  %549 = vmatprep.subr.mxu0 0.0
  %550 = vmatpush1.msra.mxu0 0.0
  %551 = vmatprep.subr.mxu0 0.0
  %552 = vmatpush1.msra.mxu0 0.0
  %553 = vmatprep.subr.mxu0 0.0
  %554 = vmatpush1.msra.mxu0 0.0
  %555 = vmatprep.subr.mxu0 0.0
  %556 = vmatpush1.msra.mxu0 0.0
  %557 = vmatprep.subr.mxu0 0.0
  %558 = vmatpush1.msra.mxu0 0.0
  %559 = vmatprep.subr.mxu0 0.0
  %560 = vmatpush1.msra.mxu0 0.0
  %561 = vmatprep.subr.mxu0 0.0
  %562 = vmatpush1.msra.mxu0 0.0
  %563 = vmatprep.subr.mxu0 0.0
  %564 = vmatpush1.msra.mxu0 0.0
  %565 = vmatprep.subr.mxu0 0.0
  %566 = vmatpush1.msra.mxu0 0.0
  %567 = vmatprep.subr.mxu0 0.0
  %568 = vmatpush1.msra.mxu0 0.0
  %569 = vmatprep.subr.mxu0 0.0
  %570 = vmatpush1.msra.mxu0 0.0
  %571 = vmatprep.subr.mxu0 0.0
  %572 = vmatpush1.msra.mxu0 0.0
  %573 = vmatprep.subr.mxu0 0.0
  %574 = vmatpush1.msra.mxu0 0.0
  %575 = vmatprep.subr.mxu0 0.0
  %576 = vmatpush1.msra.mxu0 0.0
  %577 = vmatprep.subr.mxu0 0.0
  %578 = vmatpush1.msra.mxu0 0.0
  %579 = vmatprep.mubr.f32.mxu0 0.0
  %580 = vmatmul.mubr.f32.gmra.mrb[0].mxu0 %v504
  %v581 = vpop.f32.mrb[0].mxu0
  %v582 = vadd.f32 %v502, %v581
  %v583 = vpop.f32.mrb[0].mxu0
  %584 = vmatprep.mubr.f32.mxu0 0.0
  %585 = vmatmul.mubr.f32.gmra.mrb[0].mxu0 %v507
  %v586 = vpop.f32.mrb[0].mxu0
  %v587 = vadd.f32 %v502, %v586
  %v588 = vpop.f32.mrb[0].mxu0
  %589 = vmatprep.mubr.f32.mxu0 0.0
  %590 = vmatmul.mubr.f32.gmra.mrb[0].mxu0 %v510
  %v591 = vpop.f32.mrb[0].mxu0
  %v592 = vadd.f32 %v502, %v591
  %v593 = vpop.f32.mrb[0].mxu0
  %594 = vmatprep.mubr.f32.mxu0 0.0
  %595 = vmatmul.mubr.f32.gmra.mrb[0].mxu0 %v513
  %v596 = vpop.f32.mrb[0].mxu0
  %v597 = vadd.f32 %v502, %v596
  %v598 = vpop.f32.mrb[0].mxu0
  %599 = vdwg.mxu0
  %v600 = vmax.f32 %v582, 0.0
  %v601 = vmax.f32 %v587, 0.0
  %v602 = vmax.f32 %v592, 0.0
  %v603 = vmax.f32 %v597, 0.0
  %604 = vrot.lane.b32.xlu0 %v24, 30
  %v605 = vpop.permute.xlu0 %604
  %606 = vrot.lane.b32.xlu0 %v25, 30
  %v607 = vpop.permute.xlu0 %606
  %608 = vrot.lane.b32.xlu0 %v26, 30
  %v609 = vpop.permute.xlu0 %608
  %610 = vrot.lane.b32.xlu0 %v27, 30
  %v611 = vpop.permute.xlu0 %610
  %v616 = vsel %vm90, %v600, %v605
  %v617 = vsel %vm90, %v601, %v607
  %v618 = vsel %vm90, %v602, %v609
  %v619 = vsel %vm90, %v603, %v611
  %v620 = vld [vmem:[%s2] sm:$0xff]
  %v621 = vld [vmem:[%s2 + $0x8] sm:$0xff]
  %v623 = vsel %vm90, %v620, 0
  %v626 = vsel %vm90, %v621, 0
  %628 = vmatprep.subr.mxu0 0.0
  %629 = vmatpush1.msra.mxu0 %v616
  %630 = vmatprep.subr.mxu0 0.0
  %631 = vmatpush1.msra.mxu0 %v617
  %632 = vmatprep.subr.mxu0 0.0
  %633 = vmatpush1.msra.mxu0 %v618
  %634 = vmatprep.subr.mxu0 0.0
  %635 = vmatpush1.msra.mxu0 %v619
  %636 = vmatprep.subr.mxu0 0.0
  %637 = vmatpush1.msra.mxu0 0.0
  %638 = vmatprep.subr.mxu0 0.0
  %639 = vmatpush1.msra.mxu0 0.0
  %640 = vmatprep.subr.mxu0 0.0
  %641 = vmatpush1.msra.mxu0 0.0
  %642 = vmatprep.subr.mxu0 0.0
  %643 = vmatpush1.msra.mxu0 0.0
  %644 = vmatprep.subr.mxu0 0.0
  %645 = vmatpush1.msra.mxu0 0.0
  %646 = vmatprep.subr.mxu0 0.0
  %647 = vmatpush1.msra.mxu0 0.0
  %648 = vmatprep.subr.mxu0 0.0
  %649 = vmatpush1.msra.mxu0 0.0
  %650 = vmatprep.subr.mxu0 0.0
  %651 = vmatpush1.msra.mxu0 0.0
  %652 = vmatprep.subr.mxu0 0.0
  %653 = vmatpush1.msra.mxu0 0.0
  %654 = vmatprep.subr.mxu0 0.0
  %655 = vmatpush1.msra.mxu0 0.0
  %656 = vmatprep.subr.mxu0 0.0
  %657 = vmatpush1.msra.mxu0 0.0
  %658 = vmatprep.subr.mxu0 0.0
  %659 = vmatpush1.msra.mxu0 0.0
  %660 = vmatprep.subr.mxu0 0.0
  %661 = vmatpush1.msra.mxu0 0.0
  %662 = vmatprep.subr.mxu0 0.0
  %663 = vmatpush1.msra.mxu0 0.0
  %664 = vmatprep.subr.mxu0 0.0
  %665 = vmatpush1.msra.mxu0 0.0
  %666 = vmatprep.subr.mxu0 0.0
  %667 = vmatpush1.msra.mxu0 0.0
  %668 = vmatprep.subr.mxu0 0.0
  %669 = vmatpush1.msra.mxu0 0.0
  %670 = vmatprep.subr.mxu0 0.0
  %671 = vmatpush1.msra.mxu0 0.0
  %672 = vmatprep.subr.mxu0 0.0
  %673 = vmatpush1.msra.mxu0 0.0
  %674 = vmatprep.subr.mxu0 0.0
  %675 = vmatpush1.msra.mxu0 0.0
  %676 = vmatprep.subr.mxu0 0.0
  %677 = vmatpush1.msra.mxu0 0.0
  %678 = vmatprep.subr.mxu0 0.0
  %679 = vmatpush1.msra.mxu0 0.0
  %680 = vmatprep.subr.mxu0 0.0
  %681 = vmatpush1.msra.mxu0 0.0
  %682 = vmatprep.subr.mxu0 0.0
  %683 = vmatpush1.msra.mxu0 0.0
  %684 = vmatprep.subr.mxu0 0.0
  %685 = vmatpush1.msra.mxu0 0.0
  %686 = vmatprep.subr.mxu0 0.0
  %687 = vmatpush1.msra.mxu0 0.0
  %688 = vmatprep.subr.mxu0 0.0
  %689 = vmatpush1.msra.mxu0 0.0
  %690 = vmatprep.subr.mxu0 0.0
  %691 = vmatpush1.msra.mxu0 0.0
  %692 = vmatprep.mubr.f32.mxu0 0.0
  %693 = vmatmul.mubr.f32.gmra.mrb[0].mxu0 %v623
  %v694 = vpop.f32.mrb[0].mxu0
  %v695 = vadd.f32 0.0, %v694
  %v696 = vpop.f32.mrb[0].mxu0
  %697 = vmatprep.mubr.f32.mxu0 0.0
  %698 = vmatmul.mubr.f32.gmra.mrb[0].mxu0 %v626
  %v699 = vpop.f32.mrb[0].mxu0
  %v700 = vadd.f32 0.0, %v699
  %v701 = vpop.f32.mrb[0].mxu0
  %702 = vdwg.mxu0
  %v703 = vlaneseq
  %v704 = vshrl.u32 %v703, 7
  %v705 = vlaneseq
  %v706 = vand.u32 %v705, 127
  %v707 = vmul.u32 %v706, 4
  %vm708 = vcmp.ge.s32.totalorder %v704, %v707
  %v709 = vadd.s32 %v706, 1
  %v710 = vmul.u32 %v709, 4
  %vm711 = vcmp.lt.s32.totalorder %v704, %v710
  %vm712 = vmand %vm708, %vm711
  %v713 = vsel %vm712, 1, 0
  %v714 = vcvt.s32.f32 %v713
  %vm715 = vcmask 15360
  %v717 = vsel %vm715, %v714, 0
  %vm719 = vcmask 1041408
  %v721 = vsel %vm719, %v700, 0
  %723 = vmatprep.subr.mxu0 0.0
  %724 = vmatpush1.msra.mxu0 %v721
  %725 = vmatprep.subr.mxu0 0.0
  %726 = vmatpush1.msra.mxu0 0.0
  %727 = vmatprep.subr.mxu0 0.0
  %728 = vmatpush1.msra.mxu0 0.0
  %729 = vmatprep.subr.mxu0 0.0
  %730 = vmatpush1.msra.mxu0 0.0
  %731 = vmatprep.subr.mxu0 0.0
  %732 = vmatpush1.msra.mxu0 0.0
  %733 = vmatprep.subr.mxu0 0.0
  %734 = vmatpush1.msra.mxu0 0.0
  %735 = vmatprep.subr.mxu0 0.0
  %736 = vmatpush1.msra.mxu0 0.0
  %737 = vmatprep.subr.mxu0 0.0
  %738 = vmatpush1.msra.mxu0 0.0
  %739 = vmatprep.subr.mxu0 0.0
  %740 = vmatpush1.msra.mxu0 0.0
  %741 = vmatprep.subr.mxu0 0.0
  %742 = vmatpush1.msra.mxu0 0.0
  %743 = vmatprep.subr.mxu0 0.0
  %744 = vmatpush1.msra.mxu0 0.0
  %745 = vmatprep.subr.mxu0 0.0
  %746 = vmatpush1.msra.mxu0 0.0
  %747 = vmatprep.subr.mxu0 0.0
  %748 = vmatpush1.msra.mxu0 0.0
  %749 = vmatprep.subr.mxu0 0.0
  %750 = vmatpush1.msra.mxu0 0.0
  %751 = vmatprep.subr.mxu0 0.0
  %752 = vmatpush1.msra.mxu0 0.0
  %753 = vmatprep.subr.mxu0 0.0
  %754 = vmatpush1.msra.mxu0 0.0
  %755 = vmatprep.subr.mxu0 0.0
  %756 = vmatpush1.msra.mxu0 0.0
  %757 = vmatprep.subr.mxu0 0.0
  %758 = vmatpush1.msra.mxu0 0.0
  %759 = vmatprep.subr.mxu0 0.0
  %760 = vmatpush1.msra.mxu0 0.0
  %761 = vmatprep.subr.mxu0 0.0
  %762 = vmatpush1.msra.mxu0 0.0
  %763 = vmatprep.subr.mxu0 0.0
  %764 = vmatpush1.msra.mxu0 0.0
  %765 = vmatprep.subr.mxu0 0.0
  %766 = vmatpush1.msra.mxu0 0.0
  %767 = vmatprep.subr.mxu0 0.0
  %768 = vmatpush1.msra.mxu0 0.0
  %769 = vmatprep.subr.mxu0 0.0
  %770 = vmatpush1.msra.mxu0 0.0
  %771 = vmatprep.subr.mxu0 0.0
  %772 = vmatpush1.msra.mxu0 0.0
  %773 = vmatprep.subr.mxu0 0.0
  %774 = vmatpush1.msra.mxu0 0.0
  %775 = vmatprep.subr.mxu0 0.0
  %776 = vmatpush1.msra.mxu0 0.0
  %777 = vmatprep.subr.mxu0 0.0
  %778 = vmatpush1.msra.mxu0 0.0
  %779 = vmatprep.subr.mxu0 0.0
  %780 = vmatpush1.msra.mxu0 0.0
  %781 = vmatprep.subr.mxu0 0.0
  %782 = vmatpush1.msra.mxu0 0.0
  %783 = vmatprep.subr.mxu0 0.0
  %784 = vmatpush1.msra.mxu0 0.0
  %785 = vmatprep.subr.mxu0 0.0
  %786 = vmatpush1.msra.mxu0 0.0
  %787 = vmatprep.mubr.f32.mxu0 0.0
  %788 = vmatmul.mubr.f32.gmra.mrb[0].mxu0 %v717
  %v789 = vpop.f32.mrb[0].mxu0
  %v790 = vadd.f32 0.0, %v789
  %v791 = vpop.f32.mrb[0].mxu0
  %792 = vdwg.mxu0
  %794 = vrot.lane.b32.xlu0 %v790, 32
  %v795 = vpop.permute.xlu0 %794
  %v797 = vsel %vm90, %v695, %v795
  %v798 = vld [vmem:[%s4 + $0x68] sm:$0xff]
  %v799 = vld [vmem:[%s4 + $0x70] sm:$0xff]
  %v800 = vld [vmem:[%s4 + $0x78] sm:$0xff]
  %v801 = vld [vmem:[%s4 + $0x80] sm:$0xff]
  %v802 = vld [vmem:[%s4 + $0x88] sm:$0xff]
  %v803 = vld [vmem:[%s4 + $0x90] sm:$0xff]
  %v804 = vld [vmem:[%s4 + $0x98] sm:$0xff]
  %v805 = vld [vmem:[%s4 + $0xa0] sm:$0xff]
  %v806 = vlaneseq
  %v807 = vshrl.u32 %v806, 7
  %v808 = vsub.s32 4, %v807
  %v809 = vrot.slane %v28, %v808
  %vm810 = vcmask 523264
  %v812 = vsel %vm810, %v797, 0
  %814 = vmatprep.subr.mxu0 0.0
  %815 = vmatpush1.msra.mxu0 %v798
  %816 = vmatprep.subr.mxu0 0.0
  %817 = vmatpush1.msra.mxu0 %v799
  %818 = vmatprep.subr.mxu0 0.0
  %819 = vmatpush1.msra.mxu0 %v800
  %820 = vmatprep.subr.mxu0 0.0
  %821 = vmatpush1.msra.mxu0 %v801
  %822 = vmatprep.subr.mxu0 0.0
  %823 = vmatpush1.msra.mxu0 %v802
  %824 = vmatprep.subr.mxu0 0.0
  %825 = vmatpush1.msra.mxu0 %v803
  %826 = vmatprep.subr.mxu0 0.0
  %827 = vmatpush1.msra.mxu0 %v804
  %828 = vmatprep.subr.mxu0 0.0
  %829 = vmatpush1.msra.mxu0 %v805
  %830 = vmatprep.subr.mxu0 0.0
  %831 = vmatpush1.msra.mxu0 0.0
  %832 = vmatprep.subr.mxu0 0.0
  %833 = vmatpush1.msra.mxu0 0.0
  %834 = vmatprep.subr.mxu0 0.0
  %835 = vmatpush1.msra.mxu0 0.0
  %836 = vmatprep.subr.mxu0 0.0
  %837 = vmatpush1.msra.mxu0 0.0
  %838 = vmatprep.subr.mxu0 0.0
  %839 = vmatpush1.msra.mxu0 0.0
  %840 = vmatprep.subr.mxu0 0.0
  %841 = vmatpush1.msra.mxu0 0.0
  %842 = vmatprep.subr.mxu0 0.0
  %843 = vmatpush1.msra.mxu0 0.0
  %844 = vmatprep.subr.mxu0 0.0
  %845 = vmatpush1.msra.mxu0 0.0
  %846 = vmatprep.subr.mxu0 0.0
  %847 = vmatpush1.msra.mxu0 0.0
  %848 = vmatprep.subr.mxu0 0.0
  %849 = vmatpush1.msra.mxu0 0.0
  %850 = vmatprep.subr.mxu0 0.0
  %851 = vmatpush1.msra.mxu0 0.0
  %852 = vmatprep.subr.mxu0 0.0
  %853 = vmatpush1.msra.mxu0 0.0
  %854 = vmatprep.subr.mxu0 0.0
  %855 = vmatpush1.msra.mxu0 0.0
  %856 = vmatprep.subr.mxu0 0.0
  %857 = vmatpush1.msra.mxu0 0.0
  %858 = vmatprep.subr.mxu0 0.0
  %859 = vmatpush1.msra.mxu0 0.0
  %860 = vmatprep.subr.mxu0 0.0
  %861 = vmatpush1.msra.mxu0 0.0
  %862 = vmatprep.subr.mxu0 0.0
  %863 = vmatpush1.msra.mxu0 0.0
  %864 = vmatprep.subr.mxu0 0.0
  %865 = vmatpush1.msra.mxu0 0.0
  %866 = vmatprep.subr.mxu0 0.0
  %867 = vmatpush1.msra.mxu0 0.0
  %868 = vmatprep.subr.mxu0 0.0
  %869 = vmatpush1.msra.mxu0 0.0
  %870 = vmatprep.subr.mxu0 0.0
  %871 = vmatpush1.msra.mxu0 0.0
  %872 = vmatprep.subr.mxu0 0.0
  %873 = vmatpush1.msra.mxu0 0.0
  %874 = vmatprep.subr.mxu0 0.0
  %875 = vmatpush1.msra.mxu0 0.0
  %876 = vmatprep.subr.mxu0 0.0
  %877 = vmatpush1.msra.mxu0 0.0
  %878 = vmatprep.mubr.f32.mxu0 0.0
  %879 = vmatmul.mubr.f32.gmra.mrb[0].mxu0 %v812
  %v880 = vpop.f32.mrb[0].mxu0
  %v881 = vadd.f32 %v809, %v880
  %v882 = vpop.f32.mrb[0].mxu0
  %883 = vdwg.mxu0
  %v884 = vtanh.pop %v881
  %v885 = vld [vmem:[%s4 + $0xa8] sm:$0xff]
  %v886 = vld [vmem:[%s4 + $0xb0] sm:$0xff]
  %v887 = vld [vmem:[%s4 + $0xb8] sm:$0xff]
  %v888 = vld [vmem:[%s4 + $0xc0] sm:$0xff]
  %v889 = vlaneseq
  %v890 = vshrl.u32 %v889, 7
  %v891 = vsub.s32 5, %v890
  %v892 = vrot.slane %v28, %v891
  %v894 = vsel %vm90, %v884, 0
  %896 = vmatprep.subr.mxu0 0.0
  %897 = vmatpush1.msra.mxu0 %v885
  %898 = vmatprep.subr.mxu0 0.0
  %899 = vmatpush1.msra.mxu0 %v886
  %900 = vmatprep.subr.mxu0 0.0
  %901 = vmatpush1.msra.mxu0 %v887
  %902 = vmatprep.subr.mxu0 0.0
  %903 = vmatpush1.msra.mxu0 %v888
  %904 = vmatprep.subr.mxu0 0.0
  %905 = vmatpush1.msra.mxu0 0.0
  %906 = vmatprep.subr.mxu0 0.0
  %907 = vmatpush1.msra.mxu0 0.0
  %908 = vmatprep.subr.mxu0 0.0
  %909 = vmatpush1.msra.mxu0 0.0
  %910 = vmatprep.subr.mxu0 0.0
  %911 = vmatpush1.msra.mxu0 0.0
  %912 = vmatprep.subr.mxu0 0.0
  %913 = vmatpush1.msra.mxu0 0.0
  %914 = vmatprep.subr.mxu0 0.0
  %915 = vmatpush1.msra.mxu0 0.0
  %916 = vmatprep.subr.mxu0 0.0
  %917 = vmatpush1.msra.mxu0 0.0
  %918 = vmatprep.subr.mxu0 0.0
  %919 = vmatpush1.msra.mxu0 0.0
  %920 = vmatprep.subr.mxu0 0.0
  %921 = vmatpush1.msra.mxu0 0.0
  %922 = vmatprep.subr.mxu0 0.0
  %923 = vmatpush1.msra.mxu0 0.0
  %924 = vmatprep.subr.mxu0 0.0
  %925 = vmatpush1.msra.mxu0 0.0
  %926 = vmatprep.subr.mxu0 0.0
  %927 = vmatpush1.msra.mxu0 0.0
  %928 = vmatprep.subr.mxu0 0.0
  %929 = vmatpush1.msra.mxu0 0.0
  %930 = vmatprep.subr.mxu0 0.0
  %931 = vmatpush1.msra.mxu0 0.0
  %932 = vmatprep.subr.mxu0 0.0
  %933 = vmatpush1.msra.mxu0 0.0
  %934 = vmatprep.subr.mxu0 0.0
  %935 = vmatpush1.msra.mxu0 0.0
  %936 = vmatprep.subr.mxu0 0.0
  %937 = vmatpush1.msra.mxu0 0.0
  %938 = vmatprep.subr.mxu0 0.0
  %939 = vmatpush1.msra.mxu0 0.0
  %940 = vmatprep.subr.mxu0 0.0
  %941 = vmatpush1.msra.mxu0 0.0
  %942 = vmatprep.subr.mxu0 0.0
  %943 = vmatpush1.msra.mxu0 0.0
  %944 = vmatprep.subr.mxu0 0.0
  %945 = vmatpush1.msra.mxu0 0.0
  %946 = vmatprep.subr.mxu0 0.0
  %947 = vmatpush1.msra.mxu0 0.0
  %948 = vmatprep.subr.mxu0 0.0
  %949 = vmatpush1.msra.mxu0 0.0
  %950 = vmatprep.subr.mxu0 0.0
  %951 = vmatpush1.msra.mxu0 0.0
  %952 = vmatprep.subr.mxu0 0.0
  %953 = vmatpush1.msra.mxu0 0.0
  %954 = vmatprep.subr.mxu0 0.0
  %955 = vmatpush1.msra.mxu0 0.0
  %956 = vmatprep.subr.mxu0 0.0
  %957 = vmatpush1.msra.mxu0 0.0
  %958 = vmatprep.subr.mxu0 0.0
  %959 = vmatpush1.msra.mxu0 0.0
  %960 = vmatprep.mubr.f32.mxu0 0.0
  %961 = vmatmul.mubr.f32.gmra.mrb[0].mxu0 %v894
  %v962 = vpop.f32.mrb[0].mxu0
  %v963 = vadd.f32 %v892, %v962
  %v964 = vpop.f32.mrb[0].mxu0
  %965 = vdwg.mxu0
  %v966 = vtanh.pop %v963
  %v968 = vrot.slane %v28, 6
  %v969 = vsel %vm90, %v968, 0
  %v972 = vsel %vm90, %v966, 0
  %974 = vmatprep.subr.mxu0 0.0
  %975 = vmatpush1.xpose.msra.mxu0 %v972
  %976 = vmatprep.subr.mxu0 0.0
  %977 = vmatpush1.xpose.msra.mxu0 0.0
  %978 = vmatprep.subr.mxu0 0.0
  %979 = vmatpush1.xpose.msra.mxu0 0.0
  %980 = vmatprep.subr.mxu0 0.0
  %981 = vmatpush1.xpose.msra.mxu0 0.0
  %982 = vmatprep.subr.mxu0 0.0
  %983 = vmatpush1.xpose.msra.mxu0 0.0
  %984 = vmatprep.subr.mxu0 0.0
  %985 = vmatpush1.xpose.msra.mxu0 0.0
  %986 = vmatprep.subr.mxu0 0.0
  %987 = vmatpush1.xpose.msra.mxu0 0.0
  %988 = vmatprep.subr.mxu0 0.0
  %989 = vmatpush1.xpose.msra.mxu0 0.0
  %990 = vmatprep.subr.mxu0 0.0
  %991 = vmatpush1.xpose.msra.mxu0 0.0
  %992 = vmatprep.subr.mxu0 0.0
  %993 = vmatpush1.xpose.msra.mxu0 0.0
  %994 = vmatprep.subr.mxu0 0.0
  %995 = vmatpush1.xpose.msra.mxu0 0.0
  %996 = vmatprep.subr.mxu0 0.0
  %997 = vmatpush1.xpose.msra.mxu0 0.0
  %998 = vmatprep.subr.mxu0 0.0
  %999 = vmatpush1.xpose.msra.mxu0 0.0
  %1000 = vmatprep.subr.mxu0 0.0
  %1001 = vmatpush1.xpose.msra.mxu0 0.0
  %1002 = vmatprep.subr.mxu0 0.0
  %1003 = vmatpush1.xpose.msra.mxu0 0.0
  %1004 = vmatprep.subr.mxu0 0.0
  %1005 = vmatpush1.xpose.msra.mxu0 0.0
  %1006 = vmatprep.subr.mxu0 0.0
  %1007 = vmatpush1.xpose.msra.mxu0 0.0
  %1008 = vmatprep.subr.mxu0 0.0
  %1009 = vmatpush1.xpose.msra.mxu0 0.0
  %1010 = vmatprep.subr.mxu0 0.0
  %1011 = vmatpush1.xpose.msra.mxu0 0.0
  %1012 = vmatprep.subr.mxu0 0.0
  %1013 = vmatpush1.xpose.msra.mxu0 0.0
  %1014 = vmatprep.subr.mxu0 0.0
  %1015 = vmatpush1.xpose.msra.mxu0 0.0
  %1016 = vmatprep.subr.mxu0 0.0
  %1017 = vmatpush1.xpose.msra.mxu0 0.0
  %1018 = vmatprep.subr.mxu0 0.0
  %1019 = vmatpush1.xpose.msra.mxu0 0.0
  %1020 = vmatprep.subr.mxu0 0.0
  %1021 = vmatpush1.xpose.msra.mxu0 0.0
  %1022 = vmatprep.subr.mxu0 0.0
  %1023 = vmatpush1.xpose.msra.mxu0 0.0
  %1024 = vmatprep.subr.mxu0 0.0
  %1025 = vmatpush1.xpose.msra.mxu0 0.0
  %1026 = vmatprep.subr.mxu0 0.0
  %1027 = vmatpush1.xpose.msra.mxu0 0.0
  %1028 = vmatprep.subr.mxu0 0.0
  %1029 = vmatpush1.xpose.msra.mxu0 0.0
  %1030 = vmatprep.subr.mxu0 0.0
  %1031 = vmatpush1.xpose.msra.mxu0 0.0
  %1032 = vmatprep.subr.mxu0 0.0
  %1033 = vmatpush1.xpose.msra.mxu0 0.0
  %1034 = vmatprep.subr.mxu0 0.0
  %1035 = vmatpush1.xpose.msra.mxu0 0.0
  %1036 = vmatprep.subr.mxu0 0.0
  %1037 = vmatpush1.xpose.msra.mxu0 0.0
  %1038 = vmatprep.mubr.f32.mxu0 0.0
  %1039 = vmatmul.mubr.f32.gmra.mrb[0].mxu0 %v969
  %v1040 = vpop.f32.mrb[0].mxu0
  %v1041 = vadd.f32 0.0, %v1040
  %v1042 = vpop.f32.mrb[0].mxu0
  %1043 = vdwg.mxu0
  %v1044 = vld [vmem:[%s3] sm:$0x3]
  %vm1045 = vcmp.gt.f32.partialorder %v1044, 0.5
  %v1046 = vsel %vm1045, -inf, %v1041
  %v1047 = vmul.u32 %v704, 4
  %vm1048 = vcmp.ge.s32.totalorder %v706, %v1047
  %v1049 = vadd.s32 %v704, 1
  %v1050 = vmul.u32 %v1049, 4
  %vm1051 = vcmp.lt.s32.totalorder %v706, %v1050
  %vm1052 = vmand %vm1048, %vm1051
  %v1053 = vlaneseq
  %v1054 = vshrl.u32 %v1053, 7
  %v1055 = vsub.s32 0, %v1054
  %v1056 = vrot.slane %v1046, %v1055
  %v1057 = vsel %vm1052, %v1056, -inf
  %vm1058 = vcmask 58368
  %v1059 = vsel %vm1058, %v1057, -inf
  %1060 = vmax.xlane.f32.xlu0 %v1059
  %v1061 = vpop.xlane.xlu0 %1060
  %v1062 = vcvt.s32.f32 %v706
  %vm1063 = vcmp.ge.f32.partialorder %v1057, %v1061
  %vm1064 = vmand %vm1063, %vm1052
  %v1065 = vsel %vm1064, %v1062, 8.0
  %v1066 = vsel %vm1058, %v1065, inf
  %1067 = vmin.xlane.f32.xlu0 %v1066
  %v1068 = vpop.xlane.xlu0 %1067
  %vm1069 = vcmp.eq.f32.partialorder %v1062, %v1068
  %v1070 = vsel %vm1069, 1, 0
  %v1071 = vcvt.s32.f32 %v1070
  %vm1072 = vcmask 64512
  %v1074 = vsel %vm1072, %v1071, 0
  %1076 = vmatprep.subr.mxu0 0.0
  %1077 = vmatpush1.msra.mxu0 %v695
  %1078 = vmatprep.subr.mxu0 0.0
  %1079 = vmatpush1.msra.mxu0 0.0
  %1080 = vmatprep.subr.mxu0 0.0
  %1081 = vmatpush1.msra.mxu0 0.0
  %1082 = vmatprep.subr.mxu0 0.0
  %1083 = vmatpush1.msra.mxu0 0.0
  %1084 = vmatprep.subr.mxu0 0.0
  %1085 = vmatpush1.msra.mxu0 0.0
  %1086 = vmatprep.subr.mxu0 0.0
  %1087 = vmatpush1.msra.mxu0 0.0
  %1088 = vmatprep.subr.mxu0 0.0
  %1089 = vmatpush1.msra.mxu0 0.0
  %1090 = vmatprep.subr.mxu0 0.0
  %1091 = vmatpush1.msra.mxu0 0.0
  %1092 = vmatprep.subr.mxu0 0.0
  %1093 = vmatpush1.msra.mxu0 0.0
  %1094 = vmatprep.subr.mxu0 0.0
  %1095 = vmatpush1.msra.mxu0 0.0
  %1096 = vmatprep.subr.mxu0 0.0
  %1097 = vmatpush1.msra.mxu0 0.0
  %1098 = vmatprep.subr.mxu0 0.0
  %1099 = vmatpush1.msra.mxu0 0.0
  %1100 = vmatprep.subr.mxu0 0.0
  %1101 = vmatpush1.msra.mxu0 0.0
  %1102 = vmatprep.subr.mxu0 0.0
  %1103 = vmatpush1.msra.mxu0 0.0
  %1104 = vmatprep.subr.mxu0 0.0
  %1105 = vmatpush1.msra.mxu0 0.0
  %1106 = vmatprep.subr.mxu0 0.0
  %1107 = vmatpush1.msra.mxu0 0.0
  %1108 = vmatprep.subr.mxu0 0.0
  %1109 = vmatpush1.msra.mxu0 0.0
  %1110 = vmatprep.subr.mxu0 0.0
  %1111 = vmatpush1.msra.mxu0 0.0
  %1112 = vmatprep.subr.mxu0 0.0
  %1113 = vmatpush1.msra.mxu0 0.0
  %1114 = vmatprep.subr.mxu0 0.0
  %1115 = vmatpush1.msra.mxu0 0.0
  %1116 = vmatprep.subr.mxu0 0.0
  %1117 = vmatpush1.msra.mxu0 0.0
  %1118 = vmatprep.subr.mxu0 0.0
  %1119 = vmatpush1.msra.mxu0 0.0
  %1120 = vmatprep.subr.mxu0 0.0
  %1121 = vmatpush1.msra.mxu0 0.0
  %1122 = vmatprep.subr.mxu0 0.0
  %1123 = vmatpush1.msra.mxu0 0.0
  %1124 = vmatprep.subr.mxu0 0.0
  %1125 = vmatpush1.msra.mxu0 0.0
  %1126 = vmatprep.subr.mxu0 0.0
  %1127 = vmatpush1.msra.mxu0 0.0
  %1128 = vmatprep.subr.mxu0 0.0
  %1129 = vmatpush1.msra.mxu0 0.0
  %1130 = vmatprep.subr.mxu0 0.0
  %1131 = vmatpush1.msra.mxu0 0.0
  %1132 = vmatprep.subr.mxu0 0.0
  %1133 = vmatpush1.msra.mxu0 0.0
  %1134 = vmatprep.subr.mxu0 0.0
  %1135 = vmatpush1.msra.mxu0 0.0
  %1136 = vmatprep.subr.mxu0 0.0
  %1137 = vmatpush1.msra.mxu0 0.0
  %1138 = vmatprep.subr.mxu0 0.0
  %1139 = vmatpush1.msra.mxu0 0.0
  %1140 = vmatprep.mubr.f32.mxu0 0.0
  %1141 = vmatmul.mubr.f32.gmra.mrb[0].mxu0 %v1074
  %v1142 = vpop.f32.mrb[0].mxu0
  %v1143 = vadd.f32 0.0, %v1142
  %v1144 = vpop.f32.mrb[0].mxu0
  %1145 = vdwg.mxu0
  %v1146 = vlaneseq
  %v1147 = vshrl.u32 %v1146, 7
  %v1148 = vsub.s32 1, %v1147
  %v1149 = vrot.slane %v1044, %v1148
  %v1150 = vmul.f32 %v1071, %v1149
  %v1151 = vsel %vm1058, %v1150, 0.0
  %1152 = vadd.xlane.f32.xlu0 %v1151
  %v1153 = vpop.xlane.xlu0 %1152
  %1155 = vrot.lane.b32.xlu0 %v1143, 32
  %v1156 = vpop.permute.xlu0 %1155
  %v1158 = vsel %vm90, %v700, %v1156
  %vm1159 = vcmask 588800
  %v1160 = vsel %vm1159, %v1158, %v1153
  %vm1161 = vcmask 596992
  %v1162 = vsel %vm1161, %v1160, 0.0
  %v1163 = vsel %vm719, %v1162, 0.0
  %1164 = vst [vmem:[%s5] sm:$0xff] %v1163
  // Predicated region
  $region22: #{job_actor_forward.1} parent=0 // pred_check
    _
  $region23: #{job_actor_forward.1} parent=0 // pred_check_branch
    %1166 = sbr.rel (0) target = $region25
  $region24: #{job_actor_forward.1} parent=0 // pred_region
    _
  $region25: #{job_actor_forward.1} parent=0 // pred_fallthru
    _
  // Predicated region
  $region26: #{job_actor_forward.1} parent=0 // pred_check
    _
  $region27: #{job_actor_forward.1} parent=0 // pred_check_branch
    %1168 = sbr.rel (0) target = $region29
  $region28: #{job_actor_forward.1} parent=0 // pred_region
    _
  $region29: #{job_actor_forward.1} parent=0 // pred_fallthru
    _

</llo_original>
